<compile_context>
chip_gen: v7x
topology: tpu7x:2x2x1
jax: 0.10.0
libtpu: 0.0.40
codegen_flags: <defaults>
</compile_context>

<pallas_src>
import numpy as np
import jax
import jax.numpy as jnp
from jax.experimental import pallas as pl
from jax.experimental.pallas import tpu as pltpu


def attention_kernel(drop_ref, x_ref, a_ref, o_ref):
    """One batch tile: scores -> masked softmax -> weighted sum.

    drop_ref : SMEM (1,) int32   scalar-prefetched dropout index (-1 = keep all)
    x_ref    : VMEM (TB, T, H)   word embeddings
    a_ref    : VMEM (1, H)       attention vector
    o_ref    : VMEM (TB, HP)     lane-padded output (HP = round_up(H, 128))
    """
    tb, T, H = x_ref.shape
    HP = o_ref.shape[-1]

    x = x_ref[...]                                              # (TB, T, H)
    a = jnp.broadcast_to(a_ref[...][None, :, :], (tb, 1, H))    # (TB, 1, H)

    # 1) attention scores via an MXU contraction over H -> (TB, 1, T)
    scores = jnp.einsum("bqh,bth->bqt", a, x,
                        preferred_element_type=jnp.float32)

    # 2) in-kernel word dropout: mask the dropped word's score.
    drop = drop_ref[0]
    word_ids = jax.lax.broadcasted_iota(jnp.int32, scores.shape, 2)
    scores = jnp.where(word_ids == drop, -1e30, scores)

    # 3) numerically stable softmax over the word axis (f32, EUP reciprocal).
    m = jnp.max(scores, axis=-1, keepdims=True)                 # (TB, 1, 1)
    e = jnp.exp(scores - m)                                     # (TB, 1, T)
    denom = jnp.sum(e, axis=-1, keepdims=True)                  # (TB, 1, 1)
    w = e * pl.reciprocal(denom, approx=True)                   # (TB, 1, T)

    # 4) weighted sum over words as a batched (1,T)x(T,H) MXU matmul.
    out = jnp.einsum("bqt,bth->bqh", w, x,
                     preferred_element_type=jnp.float32)        # (TB, 1, H)
    out = jnp.sum(out, axis=1)                                  # (TB, H)

    # 5) lane-dense store: pad the last dim up to a multiple of 128 lanes.
    if HP > H:
        out = jnp.concatenate(
            [out, jnp.zeros((tb, HP - H), dtype=out.dtype)], axis=-1)
    o_ref[...] = out.astype(o_ref.dtype)


def _pick_batch_tile(B, T, H, HP, budget_bytes=8 << 20):
    """Largest batch tile (multiple of 8, divides B) fitting the VMEM budget.

    Budget counts the double-buffered x tile plus the double-buffered output
    tile in f32.  Prefers >= 2 grid steps so the "parallel" batch axis can be
    sharded across TensorCores (v7x megacore); falls back to tb=B (full-array
    block, always legal) when B is not a multiple of 8.
    """
    per_row = (2 * T * H + 2 * HP) * 4
    cands = [tb for tb in range(8, B + 1, 8)
             if B % tb == 0 and tb * per_row <= budget_bytes]
    if not cands:
        return B
    multi = [tb for tb in cands if B // tb >= 2]
    return max(multi) if multi else max(cands)


def attention_forward(x_in, attention, drop_idx):
    """Pallas forward matching Attention.forward (word dropout folded in as a mask)."""
    B, T, H = x_in.shape
    HP = ((H + 127) // 128) * 128                 # lane-dense output width
    a2d = attention.reshape(1, H).astype(x_in.dtype)

    # word_dropout is only active when T >= 4 (matches the PyTorch module).
    drop = jnp.asarray([drop_idx if T >= 4 else -1], dtype=jnp.int32)

    tb = _pick_batch_tile(B, T, H, HP)

    grid_spec = pltpu.PrefetchScalarGridSpec(
        num_scalar_prefetch=1,
        grid=(B // tb,),
        in_specs=[
            pl.BlockSpec((tb, T, H), lambda b, drop_ref: (b, 0, 0),
                         memory_space=pltpu.MemorySpace.VMEM),
            pl.BlockSpec((1, H), lambda b, drop_ref: (0, 0),
                         memory_space=pltpu.MemorySpace.VMEM),
        ],
        out_specs=pl.BlockSpec((tb, HP), lambda b, drop_ref: (b, 0),
                               memory_space=pltpu.MemorySpace.VMEM),
    )

    cost = pl.CostEstimate(
        flops=4 * B * T * H,                       # two MXU contractions
        transcendentals=B * T,                     # exp in softmax
        bytes_accessed=(B * T * H + H + B * HP) * 4,
    )

    out_padded = pl.pallas_call(
        attention_kernel,
        grid_spec=grid_spec,
        out_shape=jax.ShapeDtypeStruct((B, HP), x_in.dtype),
        compiler_params=pltpu.CompilerParams(
            dimension_semantics=("parallel",),
            vmem_limit_bytes=32 * 1024 * 1024,
        ),
        cost_estimate=cost,
    )(drop, x_in, a2d)

    return out_padded[:, :H]


def reference_forward(x_in, attention, drop_idx):
    """Pure-JAX reference reproducing the PyTorch forward (explicit word removal)."""
    B, T, H = x_in.shape
    if T >= 4 and drop_idx >= 0:
        x = jnp.concatenate([x_in[:, :drop_idx], x_in[:, drop_idx + 1:]], axis=1)
    else:
        x = x_in
    scores = jnp.squeeze(jnp.matmul(x, attention), axis=-1)     # (B, T')
    w = jax.nn.softmax(scores, axis=1)[:, :, None]              # (B, T', 1)
    return jnp.sum(x * w, axis=1)                               # (B, H)


if __name__ == "__main__":
    B, T, H = 16, 8, 32   # batch tiled over the grid; seq=8, hidden=32

    key = jax.random.PRNGKey(0)
    kx, ka = jax.random.split(key)
    x_in = jax.random.normal(kx, (B, T, H), dtype=jnp.float32)

    # Xavier-normal init for the (H, 1) attention parameter.
    std = float(np.sqrt(2.0 / (H + 1)))
    attention = jax.random.normal(ka, (H, 1), dtype=jnp.float32) * std

    # Deterministic word-dropout index (mirrors np.random.randint in the spec);
    # the same index is used for the kernel mask and the reference removal.
    # TODO(synk): for in-kernel stochastic dropout, draw the index with
    # pltpu.prng_seed / pltpu.prng_random_bits instead of host-side numpy.
    drop_idx = int(np.random.RandomState(0).randint(T)) if T >= 4 else -1

    out = jax.block_until_ready(attention_forward(x_in, attention, drop_idx))
    ref = jax.block_until_ready(reference_forward(x_in, attention, drop_idx))

    np.testing.assert_allclose(np.asarray(out), np.asarray(ref),
                               rtol=5e-3, atol=5e-3)
    print("KERNEL_OK")
</pallas_src>

<mosaic_0001>
module attributes {stable_mosaic.version = 11 : i64} {
  func.func @attention_kernel(%arg0: i32, %arg1: memref<1xi32, #tpu.memory_space<smem>>, %arg2: memref<8x8x32xf32, #tpu.memory_space<vmem>>, %arg3: memref<1x32xf32, #tpu.memory_space<vmem>>, %arg4: memref<8x128xf32, #tpu.memory_space<vmem>>) attributes {dimension_semantics = [#tpu.dimension_semantics<parallel>], iteration_bounds = array<i64: 2>, scalar_prefetch = 1 : i64, scratch_operands = 0 : i64, tpu.core_type = #tpu.core_type<tc>, window_params = [{transform_indices = @transform_0, window_bounds = array<i64: 8, 8, 32>}, {pipeline_mode = #tpu.pipeline_mode<synchronous>, transform_indices = @transform_1, window_bounds = array<i64: 1, 32>}, {transform_indices = @transform_2, window_bounds = array<i64: 8, 128>}]} {
    %c0 = arith.constant 0 : index
    %c0_0 = arith.constant 0 : index
    %c0_1 = arith.constant 0 : index
    %0 = vector.load %arg2[%c0, %c0_0, %c0_1] : memref<8x8x32xf32, #tpu.memory_space<vmem>>, vector<8x8x32xf32>
    %c0_2 = arith.constant 0 : index
    %c0_3 = arith.constant 0 : index
    %1 = vector.load %arg3[%c0_2, %c0_3] : memref<1x32xf32, #tpu.memory_space<vmem>>, vector<1x32xf32>
    %2 = vector.shape_cast %1 : vector<1x32xf32> to vector<1x1x32xf32>
    %3 = vector.shape_cast %2 : vector<1x1x32xf32> to vector<1x1x32xf32>
    %4 = vector.broadcast %3 : vector<1x1x32xf32> to vector<8x1x32xf32>
    "tpu.trace_start"() <{level = 10 : i32, message = "bqh,bth->bqt"}> : () -> ()
    %cst = arith.constant dense<0.000000e+00> : vector<8x1x8xf32>
    %5 = tpu.matmul %4, %0, %cst {dimension_numbers = #tpu.dot_dimension_numbers<[2], [2], [1], [1], [0, 0, 0, 1, 1, 1], [0], [0]>} : vector<8x1x32xf32>, vector<8x8x32xf32>, vector<8x1x8xf32> -> vector<8x1x8xf32>
    "tpu.trace_stop"() : () -> ()
    %c0_4 = arith.constant 0 : index
    %6 = memref.load %arg1[%c0_4] : memref<1xi32, #tpu.memory_space<smem>>
    %7 = tpu.iota {dimensions = array<i32: 2>} : vector<8x1x8xi32>
    %8 = vector.broadcast %6 : i32 to vector<8x1x8xi32>
    %9 = arith.cmpi eq, %7, %8 : vector<8x1x8xi32>
    %cst_5 = arith.constant -1.000000e+30 : f32
    %10 = vector.broadcast %cst_5 : f32 to vector<8x1x8xf32>
    %11 = arith.select %9, %10, %5 : vector<8x1x8xi1>, vector<8x1x8xf32>
    %cst_6 = arith.constant dense<0xFF800000> : vector<8x1xf32>
    %12 = vector.multi_reduction <maximumf>, %11, %cst_6 [2] : vector<8x1x8xf32> to vector<8x1xf32>
    %13 = vector.shape_cast %12 : vector<8x1xf32> to vector<8x1x1xf32>
    %14 = vector.broadcast %13 : vector<8x1x1xf32> to vector<8x1x8xf32>
    %15 = arith.subf %11, %14 : vector<8x1x8xf32>
    %16 = math.exp %15 : vector<8x1x8xf32>
    %cst_7 = arith.constant dense<0.000000e+00> : vector<8x1xf32>
    %17 = vector.multi_reduction <add>, %16, %cst_7 [2] : vector<8x1x8xf32> to vector<8x1xf32>
    %18 = vector.shape_cast %17 : vector<8x1xf32> to vector<8x1x1xf32>
    %19 = tpu.reciprocal %18 {approx = true} : vector<8x1x1xf32> -> vector<8x1x1xf32>
    %20 = vector.broadcast %19 : vector<8x1x1xf32> to vector<8x1x8xf32>
    %21 = arith.mulf %16, %20 : vector<8x1x8xf32>
    "tpu.trace_start"() <{level = 10 : i32, message = "bqt,bth->bqh"}> : () -> ()
    %cst_8 = arith.constant dense<0.000000e+00> : vector<8x1x32xf32>
    %22 = tpu.matmul %21, %0, %cst_8 {dimension_numbers = #tpu.dot_dimension_numbers<[2], [1], [1], [2], [0, 0, 0, 1, 1, 2], [0], [0]>} : vector<8x1x8xf32>, vector<8x8x32xf32>, vector<8x1x32xf32> -> vector<8x1x32xf32>
    "tpu.trace_stop"() : () -> ()
    %cst_9 = arith.constant dense<0.000000e+00> : vector<8x32xf32>
    %23 = vector.multi_reduction <add>, %22, %cst_9 [1] : vector<8x1x32xf32> to vector<8x32xf32>
    %cst_10 = arith.constant 0.000000e+00 : f32
    %24 = vector.broadcast %cst_10 : f32 to vector<8x96xf32>
    %25 = tpu.concatenate %23, %24 in 1 : vector<8x32xf32>, vector<8x96xf32> -> vector<8x128xf32>
    %c0_11 = arith.constant 0 : index
    %c0_12 = arith.constant 0 : index
    %26 = vector.load %arg4[%c0_11, %c0_12] : memref<8x128xf32, #tpu.memory_space<vmem>>, vector<8x128xf32>
    tpu.vector_store %arg4[%c0_11, %c0_12], %25 {strides = array<i32>} : memref<8x128xf32, #tpu.memory_space<vmem>>, vector<8x128xf32>,
    return
  }
  func.func @transform_0(%arg0: i32, %arg1: memref<1xi32, #tpu.memory_space<smem>>) -> (i32, i32, i32) {
    %c0_i32 = arith.constant 0 : i32
    %c0_i32_0 = arith.constant 0 : i32
    %c0_i32_1 = arith.constant 0 : i32
    return %arg0, %c0_i32, %c0_i32_0 : i32, i32, i32
  }
  func.func @transform_1(%arg0: i32, %arg1: memref<1xi32, #tpu.memory_space<smem>>) -> (i32, i32) {
    %c0_i32 = arith.constant 0 : i32
    %c0_i32_0 = arith.constant 0 : i32
    %c0_i32_1 = arith.constant 0 : i32
    return %c0_i32, %c0_i32_0 : i32, i32
  }
  func.func @transform_2(%arg0: i32, %arg1: memref<1xi32, #tpu.memory_space<smem>>) -> (i32, i32) {
    %c0_i32 = arith.constant 0 : i32
    %c0_i32_0 = arith.constant 0 : i32
    return %arg0, %c0_i32 : i32, i32
  }
}

</mosaic_0001>

<llo_original>
// kernel: tpu_custom_call.1
$region0: #{tpu_custom_call.1}
  #allocation0 [shape = 'u32[]', space=smem, size = 0x4, offset = 0x4, fixed_abs, tag = 'smem constant byte address 0x4 - core index']
  #allocation1 [shape = 'u32[144,128]{1,0:T(1,128)}', space=vmem, size = 0x12000, scoped, tag = 'internal scratch']
  #allocation2 [shape = 's32[1]{0}', space=sflag, size = 0x4, scoped, tag = 'scoped memory for tpu_custom_call.1']
  #allocation3 [shape = 's32[1]{0:T(128)S(6)}', space=smem, size = 0x200, scoped, tag = 'prefetched SMEM operand 0']
  %s0 = inlined_call_operand.<no memory space> [shape: s32[1], index: 0, kind: input, shape index: {}]
  %s1 = inlined_call_operand.hbm [shape: f32[16,8,32], index: 1, kind: input, shape index: {}]
  %s2 = inlined_call_operand.vmem [shape: f32[1,32], index: 2, kind: input, shape index: {}]
  %s3 = inlined_call_operand.hbm [shape: f32[16,128], index: 3, kind: output, shape index: {}]
  %s4 = sld [smem:[#allocation0]]
  $region45: #{tpu_custom_call.1} parent=0
    _
  %s6 = ssub.s32 1, %s4
  %s7 = scalar_select 0, %s6, %s4
  %8 = sst [smem:[#allocation3]] %s0
  $region1: #{tpu_custom_call.1} parent=0
    #allocation4 [shape = 'u8[65536]{0}', space=vmem, size = 0x10000, scoped, tag = 'input window, operand 1']
    #allocation5 [shape = 's32[2]{0}', space=sflag, size = 0x8, scoped, tag = 'scoped memory for tpu_custom_call.1']
    #allocation6 [shape = 's32[2]{0}', space=sflag, size = 0x8, scoped, tag = 'scoped memory for tpu_custom_call.1']
    #allocation7 [shape = 'u8[8192]{0}', space=vmem, size = 0x2000, scoped, tag = 'output window, operand 0']
    %9 = vsyncpa [#allocation5], 0
    %s10 = scalar_lea.sflag [#allocation5], 1
    %11 = vsyncpa %s10, 0
    %12 = vsyncpa [#allocation6], 0
    %s13 = scalar_lea.sflag [#allocation6], 1
    %14 = vsyncpa %s13, 0
    loop: start=0, step=1, limit=4
    $region2: #{tpu_custom_call.1} parent=1 // loop_pre_header
      _
    $region3: #{tpu_custom_call.1} parent=1 // loop_header
      %s16 = sphi 0, %s20
      %p17 = scmp.ge.s32.totalorder %s16, 4
      %s26 = sphi 0, %s28
      %s29 = sphi 0, %s26
      %s30 = sphi 0, %s29
      %s46 = sphi 0, %s30
      %s50 = sphi 0, %s50
      %s52 = sphi 0, %s50
      %s53 = sphi 0, %s52
      %s67 = sphi 0, %s53
      %s73 = sphi 0, %s75
      %s76 = sphi 0, %s73
      %s77 = sphi 0, %s76
      %s93 = sphi 0, %s77
    $region4: #{tpu_custom_call.1} parent=1 // loop_header_branch
      %19 = sbr.rel (%p17) target = $region8
    $region5: #{tpu_custom_call.1} parent=1 // loop_body
      %s21 = ssub.s32 %s16, 1
      %s22 = ssub.s32 %s16, 2
      %s23 = sadd.s32 %s16, 1
      %s24 = ssub.s32 %s16, %s23
      %p25 = scmp.eq.s32.totalorder %s24, 0
      %s27 = sadd.s32 %s26, 1
      %s28 = scalar_select %p25, %s26, %s27
      %p31 = pneg %p25
      %p32 = scmp.eq.s32.totalorder %s16, 1
      %p33 = por %p31, %p32
      %p34 = scmp.ne.s32.totalorder %s26, %s29
      %p35 = scmp.eq.s32.totalorder %s16, 0
      %p36 = por %p34, %p35
      %p37 = scmp.ne.s32.totalorder %s26, %s29
      %p38 = scmp.eq.s32.totalorder %s21, 1
      %p39 = por %p37, %p38
      %p40 = scmp.ne.s32.totalorder %s29, %s30
      %p41 = scmp.eq.s32.totalorder %s21, 0
      %p42 = por %p40, %p41
      %p43 = scmp.ne.s32.totalorder %s29, %s30
      %p44 = scmp.eq.s32.totalorder %s22, 1
      %p45 = por %p43, %p44
      %p47 = scmp.ne.s32.totalorder %s30, %s46
      %p48 = scmp.eq.s32.totalorder %s22, 0
      %p49 = por %p47, %p48
      %s51 = sadd.s32 %s50, 1
      %p54 = scmp.eq.s32.totalorder %s16, 1
      %p55 = scmp.ne.s32.totalorder %s50, %s52
      %p56 = scmp.eq.s32.totalorder %s16, 0
      %p57 = por %p55, %p56
      %p58 = scmp.ne.s32.totalorder %s50, %s52
      %p59 = scmp.eq.s32.totalorder %s21, 1
      %p60 = por %p58, %p59
      %p61 = scmp.ne.s32.totalorder %s52, %s53
      %p62 = scmp.eq.s32.totalorder %s21, 0
      %p63 = por %p61, %p62
      %p64 = scmp.ne.s32.totalorder %s52, %s53
      %p65 = scmp.eq.s32.totalorder %s22, 1
      %p66 = por %p64, %p65
      %p68 = scmp.ne.s32.totalorder %s53, %s67
      %p69 = scmp.eq.s32.totalorder %s22, 0
      %p70 = por %p68, %p69
      %s71 = ssub.s32 %s16, %s23
      %p72 = scmp.eq.s32.totalorder %s71, 0
      %s74 = sadd.s32 %s73, 1
      %s75 = scalar_select %p72, %s73, %s74
      %p78 = pneg %p72
      %p79 = scmp.eq.s32.totalorder %s16, 1
      %p80 = por %p78, %p79
      %p81 = scmp.ne.s32.totalorder %s73, %s76
      %p82 = scmp.eq.s32.totalorder %s16, 0
      %p83 = por %p81, %p82
      %p84 = scmp.ne.s32.totalorder %s73, %s76
      %p85 = scmp.eq.s32.totalorder %s21, 1
      %p86 = por %p84, %p85
      %p87 = scmp.ne.s32.totalorder %s76, %s77
      %p88 = scmp.eq.s32.totalorder %s21, 0
      %p89 = por %p87, %p88
      %p90 = scmp.ne.s32.totalorder %s76, %s77
      %p91 = scmp.eq.s32.totalorder %s22, 1
      %p92 = por %p90, %p91
      %p94 = scmp.ne.s32.totalorder %s77, %s93
      %p95 = scmp.eq.s32.totalorder %s22, 0
      %p96 = por %p94, %p95
      %p97 = scmp.le.s32.totalorder 1, %s16
      %p98 = scmp.lt.s32.totalorder %s16, 3
      %p99 = pnand %p97, %p98
      %p100 = pneg %p99
      // Predicated region
      $region9: #{tpu_custom_call.1} parent=5 // pred_check
        _
      $region10: #{tpu_custom_call.1} parent=5 // pred_check_branch
        %102 = sbr.rel (%p99) target = $region12
      $region11: #{tpu_custom_call.1} parent=5 // pred_region
        %s103 = ssub.s32 %s16, 1
        // Predicated region
        $region13: #{tpu_custom_call.1} parent=11 // pred_check
          %p104 = pneg %p63
        $region14: #{tpu_custom_call.1} parent=11 // pred_check_branch
          %106 = sbr.rel (%p104) target = $region16
        $region15: #{tpu_custom_call.1} parent=11 // pred_region
          _
        $region16: #{tpu_custom_call.1} parent=11 // pred_fallthru
          _
      $region12: #{tpu_custom_call.1} parent=5 // pred_fallthru
        _
      %p107 = scmp.lt.s32.totalorder %s16, 2
      // Predicated region
      $region17: #{tpu_custom_call.1} parent=5 // pred_check
        %p108 = pneg %p107
      $region18: #{tpu_custom_call.1} parent=5 // pred_check_branch
        %110 = sbr.rel (%p108) target = $region20
      $region19: #{tpu_custom_call.1} parent=5 // pred_region
        // Predicated region
        $region21: #{tpu_custom_call.1} parent=19 // pred_check
          %p111 = pneg %p36
        $region22: #{tpu_custom_call.1} parent=19 // pred_check_branch
          %113 = sbr.rel (%p111) target = $region24
        $region23: #{tpu_custom_call.1} parent=19 // pred_region
          %s114 = sand.u32 %s26, 1
          %s115 = scalar_lea.sflag [#allocation5], %s114
          %s116 = sand.u32 %s26, 1
          %s117 = smul.addr %s116, 64
          %s118 = scalar_lea.vmem [#allocation4], %s117
          %s119 = smul.u32 8, %s16
          %s121 = ssub.s32 1024, 1024
          %122 = vsyncadd %s115, %s121
          %s123 = smul.addr %s119, 128
          %s124 = scalar_lea.hbm %s1, %s123
          %s125 = sshll.u32 %s118, 4
          %s126 = int_to_ptr.vmem [resolvable:$true] %s125
          %131 = dma.hbm_to_vmem [thread:$0]  %s124, 1024, %s126, %s115, 128, 128, 8
        $region24: #{tpu_custom_call.1} parent=19 // pred_fallthru
          _
      $region20: #{tpu_custom_call.1} parent=5 // pred_fallthru
        _
      %p132 = scmp.le.s32.totalorder 1, %s16
      %p133 = scmp.lt.s32.totalorder %s16, 3
      %p134 = pnand %p132, %p133
      %p135 = pneg %p134
      // Predicated region
      $region25: #{tpu_custom_call.1} parent=5 // pred_check
        _
      $region26: #{tpu_custom_call.1} parent=5 // pred_check_branch
        %137 = sbr.rel (%p134) target = $region28
      $region27: #{tpu_custom_call.1} parent=5 // pred_region
        %s138 = ssub.s32 %s16, 1
        %s139 = sand.u32 %s29, 1
        %s140 = scalar_lea.sflag [#allocation5], %s139
        %s141 = sand.u32 %s29, 1
        %s142 = smul.addr %s141, 64
        %s143 = scalar_lea.vmem [#allocation4], %s142
        // Predicated region
        $region29: #{tpu_custom_call.1} parent=27 // pred_check
          %p144 = pneg %p42
        $region30: #{tpu_custom_call.1} parent=27 // pred_check_branch
          %146 = sbr.rel (%p144) target = $region32
        $region31: #{tpu_custom_call.1} parent=27 // pred_region
          %147 = dma.done %s140, 1024
        $region32: #{tpu_custom_call.1} parent=27 // pred_fallthru
          _
        %s148 = sand.u32 %s29, 1
        %s149 = scalar_lea.sflag [#allocation5], %s148
        %s150 = sand.u32 %s29, 1
        %s151 = smul.addr %s150, 64
        %s152 = scalar_lea.vmem [#allocation4], %s151
        %p153 = pneg %p42
        %p154 = pneg %p39
        %p155 = pneg %p63
        %p156 = pneg %p60
        %p157 = pneg %p89
        %p158 = pneg %p86
        %s159 = sand.u32 %s76, 1
        %s160 = scalar_lea.sflag [#allocation6], %s159
        %s161 = sand.u32 %s76, 1
        %s162 = smul.addr %s161, 8
        %s163 = scalar_lea.vmem [#allocation7], %s162
        %s164 = smul.u32 8, %s21
        %v165 = vld [vmem:[%s143] sm:$0xff]
        %v166 = vld [vmem:[%s143 + $0x8] sm:$0xff]
        %v167 = vld [vmem:[%s143 + $0x10] sm:$0xff]
        %v168 = vld [vmem:[%s143 + $0x18] sm:$0xff]
        %v169 = vld [vmem:[%s143 + $0x20] sm:$0xff]
        %v170 = vld [vmem:[%s143 + $0x28] sm:$0xff]
        %v171 = vld [vmem:[%s143 + $0x30] sm:$0xff]
        %v172 = vld [vmem:[%s143 + $0x38] sm:$0xff]
        %v173 = vld [vmem:[%s2] sm:$0x1]
        %vm174 = vcmask 261120
        %v176 = vsel %vm174, %v173, 0
        %v179 = vsel %vm174, %v165, 0
        %181 = vmatprep.subr.mxu0 0.0
        %182 = vmatpush1.xpose.msra.mxu0 %v179
        %183 = vmatprep.subr.mxu0 0.0
        %184 = vmatpush1.xpose.msra.mxu0 0.0
        %185 = vmatprep.subr.mxu0 0.0
        %186 = vmatpush1.xpose.msra.mxu0 0.0
        %187 = vmatprep.subr.mxu0 0.0
        %188 = vmatpush1.xpose.msra.mxu0 0.0
        %189 = vmatprep.subr.mxu0 0.0
        %190 = vmatpush1.xpose.msra.mxu0 0.0
        %191 = vmatprep.subr.mxu0 0.0
        %192 = vmatpush1.xpose.msra.mxu0 0.0
        %193 = vmatprep.subr.mxu0 0.0
        %194 = vmatpush1.xpose.msra.mxu0 0.0
        %195 = vmatprep.subr.mxu0 0.0
        %196 = vmatpush1.xpose.msra.mxu0 0.0
        %197 = vmatprep.subr.mxu0 0.0
        %198 = vmatpush1.xpose.msra.mxu0 0.0
        %199 = vmatprep.subr.mxu0 0.0
        %200 = vmatpush1.xpose.msra.mxu0 0.0
        %201 = vmatprep.subr.mxu0 0.0
        %202 = vmatpush1.xpose.msra.mxu0 0.0
        %203 = vmatprep.subr.mxu0 0.0
        %204 = vmatpush1.xpose.msra.mxu0 0.0
        %205 = vmatprep.subr.mxu0 0.0
        %206 = vmatpush1.xpose.msra.mxu0 0.0
        %207 = vmatprep.subr.mxu0 0.0
        %208 = vmatpush1.xpose.msra.mxu0 0.0
        %209 = vmatprep.subr.mxu0 0.0
        %210 = vmatpush1.xpose.msra.mxu0 0.0
        %211 = vmatprep.subr.mxu0 0.0
        %212 = vmatpush1.xpose.msra.mxu0 0.0
        %213 = vmatprep.subr.mxu0 0.0
        %214 = vmatpush1.xpose.msra.mxu0 0.0
        %215 = vmatprep.subr.mxu0 0.0
        %216 = vmatpush1.xpose.msra.mxu0 0.0
        %217 = vmatprep.subr.mxu0 0.0
        %218 = vmatpush1.xpose.msra.mxu0 0.0
        %219 = vmatprep.subr.mxu0 0.0
        %220 = vmatpush1.xpose.msra.mxu0 0.0
        %221 = vmatprep.subr.mxu0 0.0
        %222 = vmatpush1.xpose.msra.mxu0 0.0
        %223 = vmatprep.subr.mxu0 0.0
        %224 = vmatpush1.xpose.msra.mxu0 0.0
        %225 = vmatprep.subr.mxu0 0.0
        %226 = vmatpush1.xpose.msra.mxu0 0.0
        %227 = vmatprep.subr.mxu0 0.0
        %228 = vmatpush1.xpose.msra.mxu0 0.0
        %229 = vmatprep.subr.mxu0 0.0
        %230 = vmatpush1.xpose.msra.mxu0 0.0
        %231 = vmatprep.subr.mxu0 0.0
        %232 = vmatpush1.xpose.msra.mxu0 0.0
        %233 = vmatprep.subr.mxu0 0.0
        %234 = vmatpush1.xpose.msra.mxu0 0.0
        %235 = vmatprep.subr.mxu0 0.0
        %236 = vmatpush1.xpose.msra.mxu0 0.0
        %237 = vmatprep.subr.mxu0 0.0
        %238 = vmatpush1.xpose.msra.mxu0 0.0
        %239 = vmatprep.subr.mxu0 0.0
        %240 = vmatpush1.xpose.msra.mxu0 0.0
        %241 = vmatprep.subr.mxu0 0.0
        %242 = vmatpush1.xpose.msra.mxu0 0.0
        %243 = vmatprep.subr.mxu0 0.0
        %244 = vmatpush1.xpose.msra.mxu0 0.0
        %245 = vmatprep.mubr.f32.mxu0 0.0
        %246 = vmatmul.mubr.f32.gmra.mrb[0].mxu0 %v176
        %v247 = vpop.f32.mrb[0].mxu0
        %v248 = vadd.f32 0.0, %v247
        %v249 = vpop.f32.mrb[0].mxu0
        %250 = vdwg.mxu0
        %v252 = vsel %vm174, %v166, 0
        %254 = vmatprep.subr.mxu0 0.0
        %255 = vmatpush1.xpose.msra.mxu0 %v252
        %256 = vmatprep.subr.mxu0 0.0
        %257 = vmatpush1.xpose.msra.mxu0 0.0
        %258 = vmatprep.subr.mxu0 0.0
        %259 = vmatpush1.xpose.msra.mxu0 0.0
        %260 = vmatprep.subr.mxu0 0.0
        %261 = vmatpush1.xpose.msra.mxu0 0.0
        %262 = vmatprep.subr.mxu0 0.0
        %263 = vmatpush1.xpose.msra.mxu0 0.0
        %264 = vmatprep.subr.mxu0 0.0
        %265 = vmatpush1.xpose.msra.mxu0 0.0
        %266 = vmatprep.subr.mxu0 0.0
        %267 = vmatpush1.xpose.msra.mxu0 0.0
        %268 = vmatprep.subr.mxu0 0.0
        %269 = vmatpush1.xpose.msra.mxu0 0.0
        %270 = vmatprep.subr.mxu0 0.0
        %271 = vmatpush1.xpose.msra.mxu0 0.0
        %272 = vmatprep.subr.mxu0 0.0
        %273 = vmatpush1.xpose.msra.mxu0 0.0
        %274 = vmatprep.subr.mxu0 0.0
        %275 = vmatpush1.xpose.msra.mxu0 0.0
        %276 = vmatprep.subr.mxu0 0.0
        %277 = vmatpush1.xpose.msra.mxu0 0.0
        %278 = vmatprep.subr.mxu0 0.0
        %279 = vmatpush1.xpose.msra.mxu0 0.0
        %280 = vmatprep.subr.mxu0 0.0
        %281 = vmatpush1.xpose.msra.mxu0 0.0
        %282 = vmatprep.subr.mxu0 0.0
        %283 = vmatpush1.xpose.msra.mxu0 0.0
        %284 = vmatprep.subr.mxu0 0.0
        %285 = vmatpush1.xpose.msra.mxu0 0.0
        %286 = vmatprep.subr.mxu0 0.0
        %287 = vmatpush1.xpose.msra.mxu0 0.0
        %288 = vmatprep.subr.mxu0 0.0
        %289 = vmatpush1.xpose.msra.mxu0 0.0
        %290 = vmatprep.subr.mxu0 0.0
        %291 = vmatpush1.xpose.msra.mxu0 0.0
        %292 = vmatprep.subr.mxu0 0.0
        %293 = vmatpush1.xpose.msra.mxu0 0.0
        %294 = vmatprep.subr.mxu0 0.0
        %295 = vmatpush1.xpose.msra.mxu0 0.0
        %296 = vmatprep.subr.mxu0 0.0
        %297 = vmatpush1.xpose.msra.mxu0 0.0
        %298 = vmatprep.subr.mxu0 0.0
        %299 = vmatpush1.xpose.msra.mxu0 0.0
        %300 = vmatprep.subr.mxu0 0.0
        %301 = vmatpush1.xpose.msra.mxu0 0.0
        %302 = vmatprep.subr.mxu0 0.0
        %303 = vmatpush1.xpose.msra.mxu0 0.0
        %304 = vmatprep.subr.mxu0 0.0
        %305 = vmatpush1.xpose.msra.mxu0 0.0
        %306 = vmatprep.subr.mxu0 0.0
        %307 = vmatpush1.xpose.msra.mxu0 0.0
        %308 = vmatprep.subr.mxu0 0.0
        %309 = vmatpush1.xpose.msra.mxu0 0.0
        %310 = vmatprep.subr.mxu0 0.0
        %311 = vmatpush1.xpose.msra.mxu0 0.0
        %312 = vmatprep.subr.mxu0 0.0
        %313 = vmatpush1.xpose.msra.mxu0 0.0
        %314 = vmatprep.subr.mxu0 0.0
        %315 = vmatpush1.xpose.msra.mxu0 0.0
        %316 = vmatprep.subr.mxu0 0.0
        %317 = vmatpush1.xpose.msra.mxu0 0.0
        %318 = vmatprep.mubr.f32.mxu0 0.0
        %319 = vmatmul.mubr.f32.gmra.mrb[0].mxu0 %v176
        %v320 = vpop.f32.mrb[0].mxu0
        %v321 = vadd.f32 0.0, %v320
        %v322 = vpop.f32.mrb[0].mxu0
        %323 = vdwg.mxu0
        %v325 = vsel %vm174, %v167, 0
        %327 = vmatprep.subr.mxu0 0.0
        %328 = vmatpush1.xpose.msra.mxu0 %v325
        %329 = vmatprep.subr.mxu0 0.0
        %330 = vmatpush1.xpose.msra.mxu0 0.0
        %331 = vmatprep.subr.mxu0 0.0
        %332 = vmatpush1.xpose.msra.mxu0 0.0
        %333 = vmatprep.subr.mxu0 0.0
        %334 = vmatpush1.xpose.msra.mxu0 0.0
        %335 = vmatprep.subr.mxu0 0.0
        %336 = vmatpush1.xpose.msra.mxu0 0.0
        %337 = vmatprep.subr.mxu0 0.0
        %338 = vmatpush1.xpose.msra.mxu0 0.0
        %339 = vmatprep.subr.mxu0 0.0
        %340 = vmatpush1.xpose.msra.mxu0 0.0
        %341 = vmatprep.subr.mxu0 0.0
        %342 = vmatpush1.xpose.msra.mxu0 0.0
        %343 = vmatprep.subr.mxu0 0.0
        %344 = vmatpush1.xpose.msra.mxu0 0.0
        %345 = vmatprep.subr.mxu0 0.0
        %346 = vmatpush1.xpose.msra.mxu0 0.0
        %347 = vmatprep.subr.mxu0 0.0
        %348 = vmatpush1.xpose.msra.mxu0 0.0
        %349 = vmatprep.subr.mxu0 0.0
        %350 = vmatpush1.xpose.msra.mxu0 0.0
        %351 = vmatprep.subr.mxu0 0.0
        %352 = vmatpush1.xpose.msra.mxu0 0.0
        %353 = vmatprep.subr.mxu0 0.0
        %354 = vmatpush1.xpose.msra.mxu0 0.0
        %355 = vmatprep.subr.mxu0 0.0
        %356 = vmatpush1.xpose.msra.mxu0 0.0
        %357 = vmatprep.subr.mxu0 0.0
        %358 = vmatpush1.xpose.msra.mxu0 0.0
        %359 = vmatprep.subr.mxu0 0.0
        %360 = vmatpush1.xpose.msra.mxu0 0.0
        %361 = vmatprep.subr.mxu0 0.0
        %362 = vmatpush1.xpose.msra.mxu0 0.0
        %363 = vmatprep.subr.mxu0 0.0
        %364 = vmatpush1.xpose.msra.mxu0 0.0
        %365 = vmatprep.subr.mxu0 0.0
        %366 = vmatpush1.xpose.msra.mxu0 0.0
        %367 = vmatprep.subr.mxu0 0.0
        %368 = vmatpush1.xpose.msra.mxu0 0.0
        %369 = vmatprep.subr.mxu0 0.0
        %370 = vmatpush1.xpose.msra.mxu0 0.0
        %371 = vmatprep.subr.mxu0 0.0
        %372 = vmatpush1.xpose.msra.mxu0 0.0
        %373 = vmatprep.subr.mxu0 0.0
        %374 = vmatpush1.xpose.msra.mxu0 0.0
        %375 = vmatprep.subr.mxu0 0.0
        %376 = vmatpush1.xpose.msra.mxu0 0.0
        %377 = vmatprep.subr.mxu0 0.0
        %378 = vmatpush1.xpose.msra.mxu0 0.0
        %379 = vmatprep.subr.mxu0 0.0
        %380 = vmatpush1.xpose.msra.mxu0 0.0
        %381 = vmatprep.subr.mxu0 0.0
        %382 = vmatpush1.xpose.msra.mxu0 0.0
        %383 = vmatprep.subr.mxu0 0.0
        %384 = vmatpush1.xpose.msra.mxu0 0.0
        %385 = vmatprep.subr.mxu0 0.0
        %386 = vmatpush1.xpose.msra.mxu0 0.0
        %387 = vmatprep.subr.mxu0 0.0
        %388 = vmatpush1.xpose.msra.mxu0 0.0
        %389 = vmatprep.subr.mxu0 0.0
        %390 = vmatpush1.xpose.msra.mxu0 0.0
        %391 = vmatprep.mubr.f32.mxu0 0.0
        %392 = vmatmul.mubr.f32.gmra.mrb[0].mxu0 %v176
        %v393 = vpop.f32.mrb[0].mxu0
        %v394 = vadd.f32 0.0, %v393
        %v395 = vpop.f32.mrb[0].mxu0
        %396 = vdwg.mxu0
        %v398 = vsel %vm174, %v168, 0
        %400 = vmatprep.subr.mxu0 0.0
        %401 = vmatpush1.xpose.msra.mxu0 %v398
        %402 = vmatprep.subr.mxu0 0.0
        %403 = vmatpush1.xpose.msra.mxu0 0.0
        %404 = vmatprep.subr.mxu0 0.0
        %405 = vmatpush1.xpose.msra.mxu0 0.0
        %406 = vmatprep.subr.mxu0 0.0
        %407 = vmatpush1.xpose.msra.mxu0 0.0
        %408 = vmatprep.subr.mxu0 0.0
        %409 = vmatpush1.xpose.msra.mxu0 0.0
        %410 = vmatprep.subr.mxu0 0.0
        %411 = vmatpush1.xpose.msra.mxu0 0.0
        %412 = vmatprep.subr.mxu0 0.0
        %413 = vmatpush1.xpose.msra.mxu0 0.0
        %414 = vmatprep.subr.mxu0 0.0
        %415 = vmatpush1.xpose.msra.mxu0 0.0
        %416 = vmatprep.subr.mxu0 0.0
        %417 = vmatpush1.xpose.msra.mxu0 0.0
        %418 = vmatprep.subr.mxu0 0.0
        %419 = vmatpush1.xpose.msra.mxu0 0.0
        %420 = vmatprep.subr.mxu0 0.0
        %421 = vmatpush1.xpose.msra.mxu0 0.0
        %422 = vmatprep.subr.mxu0 0.0
        %423 = vmatpush1.xpose.msra.mxu0 0.0
        %424 = vmatprep.subr.mxu0 0.0
        %425 = vmatpush1.xpose.msra.mxu0 0.0
        %426 = vmatprep.subr.mxu0 0.0
        %427 = vmatpush1.xpose.msra.mxu0 0.0
        %428 = vmatprep.subr.mxu0 0.0
        %429 = vmatpush1.xpose.msra.mxu0 0.0
        %430 = vmatprep.subr.mxu0 0.0
        %431 = vmatpush1.xpose.msra.mxu0 0.0
        %432 = vmatprep.subr.mxu0 0.0
        %433 = vmatpush1.xpose.msra.mxu0 0.0
        %434 = vmatprep.subr.mxu0 0.0
        %435 = vmatpush1.xpose.msra.mxu0 0.0
        %436 = vmatprep.subr.mxu0 0.0
        %437 = vmatpush1.xpose.msra.mxu0 0.0
        %438 = vmatprep.subr.mxu0 0.0
        %439 = vmatpush1.xpose.msra.mxu0 0.0
        %440 = vmatprep.subr.mxu0 0.0
        %441 = vmatpush1.xpose.msra.mxu0 0.0
        %442 = vmatprep.subr.mxu0 0.0
        %443 = vmatpush1.xpose.msra.mxu0 0.0
        %444 = vmatprep.subr.mxu0 0.0
        %445 = vmatpush1.xpose.msra.mxu0 0.0
        %446 = vmatprep.subr.mxu0 0.0
        %447 = vmatpush1.xpose.msra.mxu0 0.0
        %448 = vmatprep.subr.mxu0 0.0
        %449 = vmatpush1.xpose.msra.mxu0 0.0
        %450 = vmatprep.subr.mxu0 0.0
        %451 = vmatpush1.xpose.msra.mxu0 0.0
        %452 = vmatprep.subr.mxu0 0.0
        %453 = vmatpush1.xpose.msra.mxu0 0.0
        %454 = vmatprep.subr.mxu0 0.0
        %455 = vmatpush1.xpose.msra.mxu0 0.0
        %456 = vmatprep.subr.mxu0 0.0
        %457 = vmatpush1.xpose.msra.mxu0 0.0
        %458 = vmatprep.subr.mxu0 0.0
        %459 = vmatpush1.xpose.msra.mxu0 0.0
        %460 = vmatprep.subr.mxu0 0.0
        %461 = vmatpush1.xpose.msra.mxu0 0.0
        %462 = vmatprep.subr.mxu0 0.0
        %463 = vmatpush1.xpose.msra.mxu0 0.0
        %464 = vmatprep.mubr.f32.mxu0 0.0
        %465 = vmatmul.mubr.f32.gmra.mrb[0].mxu0 %v176
        %v466 = vpop.f32.mrb[0].mxu0
        %v467 = vadd.f32 0.0, %v466
        %v468 = vpop.f32.mrb[0].mxu0
        %469 = vdwg.mxu0
        %v471 = vsel %vm174, %v169, 0
        %473 = vmatprep.subr.mxu0 0.0
        %474 = vmatpush1.xpose.msra.mxu0 %v471
        %475 = vmatprep.subr.mxu0 0.0
        %476 = vmatpush1.xpose.msra.mxu0 0.0
        %477 = vmatprep.subr.mxu0 0.0
        %478 = vmatpush1.xpose.msra.mxu0 0.0
        %479 = vmatprep.subr.mxu0 0.0
        %480 = vmatpush1.xpose.msra.mxu0 0.0
        %481 = vmatprep.subr.mxu0 0.0
        %482 = vmatpush1.xpose.msra.mxu0 0.0
        %483 = vmatprep.subr.mxu0 0.0
        %484 = vmatpush1.xpose.msra.mxu0 0.0
        %485 = vmatprep.subr.mxu0 0.0
        %486 = vmatpush1.xpose.msra.mxu0 0.0
        %487 = vmatprep.subr.mxu0 0.0
        %488 = vmatpush1.xpose.msra.mxu0 0.0
        %489 = vmatprep.subr.mxu0 0.0
        %490 = vmatpush1.xpose.msra.mxu0 0.0
        %491 = vmatprep.subr.mxu0 0.0
        %492 = vmatpush1.xpose.msra.mxu0 0.0
        %493 = vmatprep.subr.mxu0 0.0
        %494 = vmatpush1.xpose.msra.mxu0 0.0
        %495 = vmatprep.subr.mxu0 0.0
        %496 = vmatpush1.xpose.msra.mxu0 0.0
        %497 = vmatprep.subr.mxu0 0.0
        %498 = vmatpush1.xpose.msra.mxu0 0.0
        %499 = vmatprep.subr.mxu0 0.0
        %500 = vmatpush1.xpose.msra.mxu0 0.0
        %501 = vmatprep.subr.mxu0 0.0
        %502 = vmatpush1.xpose.msra.mxu0 0.0
        %503 = vmatprep.subr.mxu0 0.0
        %504 = vmatpush1.xpose.msra.mxu0 0.0
        %505 = vmatprep.subr.mxu0 0.0
        %506 = vmatpush1.xpose.msra.mxu0 0.0
        %507 = vmatprep.subr.mxu0 0.0
        %508 = vmatpush1.xpose.msra.mxu0 0.0
        %509 = vmatprep.subr.mxu0 0.0
        %510 = vmatpush1.xpose.msra.mxu0 0.0
        %511 = vmatprep.subr.mxu0 0.0
        %512 = vmatpush1.xpose.msra.mxu0 0.0
        %513 = vmatprep.subr.mxu0 0.0
        %514 = vmatpush1.xpose.msra.mxu0 0.0
        %515 = vmatprep.subr.mxu0 0.0
        %516 = vmatpush1.xpose.msra.mxu0 0.0
        %517 = vmatprep.subr.mxu0 0.0
        %518 = vmatpush1.xpose.msra.mxu0 0.0
        %519 = vmatprep.subr.mxu0 0.0
        %520 = vmatpush1.xpose.msra.mxu0 0.0
        %521 = vmatprep.subr.mxu0 0.0
        %522 = vmatpush1.xpose.msra.mxu0 0.0
        %523 = vmatprep.subr.mxu0 0.0
        %524 = vmatpush1.xpose.msra.mxu0 0.0
        %525 = vmatprep.subr.mxu0 0.0
        %526 = vmatpush1.xpose.msra.mxu0 0.0
        %527 = vmatprep.subr.mxu0 0.0
        %528 = vmatpush1.xpose.msra.mxu0 0.0
        %529 = vmatprep.subr.mxu0 0.0
        %530 = vmatpush1.xpose.msra.mxu0 0.0
        %531 = vmatprep.subr.mxu0 0.0
        %532 = vmatpush1.xpose.msra.mxu0 0.0
        %533 = vmatprep.subr.mxu0 0.0
        %534 = vmatpush1.xpose.msra.mxu0 0.0
        %535 = vmatprep.subr.mxu0 0.0
        %536 = vmatpush1.xpose.msra.mxu0 0.0
        %537 = vmatprep.mubr.f32.mxu0 0.0
        %538 = vmatmul.mubr.f32.gmra.mrb[0].mxu0 %v176
        %v539 = vpop.f32.mrb[0].mxu0
        %v540 = vadd.f32 0.0, %v539
        %v541 = vpop.f32.mrb[0].mxu0
        %542 = vdwg.mxu0
        %v544 = vsel %vm174, %v170, 0
        %546 = vmatprep.subr.mxu0 0.0
        %547 = vmatpush1.xpose.msra.mxu0 %v544
        %548 = vmatprep.subr.mxu0 0.0
        %549 = vmatpush1.xpose.msra.mxu0 0.0
        %550 = vmatprep.subr.mxu0 0.0
        %551 = vmatpush1.xpose.msra.mxu0 0.0
        %552 = vmatprep.subr.mxu0 0.0
        %553 = vmatpush1.xpose.msra.mxu0 0.0
        %554 = vmatprep.subr.mxu0 0.0
        %555 = vmatpush1.xpose.msra.mxu0 0.0
        %556 = vmatprep.subr.mxu0 0.0
        %557 = vmatpush1.xpose.msra.mxu0 0.0
        %558 = vmatprep.subr.mxu0 0.0
        %559 = vmatpush1.xpose.msra.mxu0 0.0
        %560 = vmatprep.subr.mxu0 0.0
        %561 = vmatpush1.xpose.msra.mxu0 0.0
        %562 = vmatprep.subr.mxu0 0.0
        %563 = vmatpush1.xpose.msra.mxu0 0.0
        %564 = vmatprep.subr.mxu0 0.0
        %565 = vmatpush1.xpose.msra.mxu0 0.0
        %566 = vmatprep.subr.mxu0 0.0
        %567 = vmatpush1.xpose.msra.mxu0 0.0
        %568 = vmatprep.subr.mxu0 0.0
        %569 = vmatpush1.xpose.msra.mxu0 0.0
        %570 = vmatprep.subr.mxu0 0.0
        %571 = vmatpush1.xpose.msra.mxu0 0.0
        %572 = vmatprep.subr.mxu0 0.0
        %573 = vmatpush1.xpose.msra.mxu0 0.0
        %574 = vmatprep.subr.mxu0 0.0
        %575 = vmatpush1.xpose.msra.mxu0 0.0
        %576 = vmatprep.subr.mxu0 0.0
        %577 = vmatpush1.xpose.msra.mxu0 0.0
        %578 = vmatprep.subr.mxu0 0.0
        %579 = vmatpush1.xpose.msra.mxu0 0.0
        %580 = vmatprep.subr.mxu0 0.0
        %581 = vmatpush1.xpose.msra.mxu0 0.0
        %582 = vmatprep.subr.mxu0 0.0
        %583 = vmatpush1.xpose.msra.mxu0 0.0
        %584 = vmatprep.subr.mxu0 0.0
        %585 = vmatpush1.xpose.msra.mxu0 0.0
        %586 = vmatprep.subr.mxu0 0.0
        %587 = vmatpush1.xpose.msra.mxu0 0.0
        %588 = vmatprep.subr.mxu0 0.0
        %589 = vmatpush1.xpose.msra.mxu0 0.0
        %590 = vmatprep.subr.mxu0 0.0
        %591 = vmatpush1.xpose.msra.mxu0 0.0
        %592 = vmatprep.subr.mxu0 0.0
        %593 = vmatpush1.xpose.msra.mxu0 0.0
        %594 = vmatprep.subr.mxu0 0.0
        %595 = vmatpush1.xpose.msra.mxu0 0.0
        %596 = vmatprep.subr.mxu0 0.0
        %597 = vmatpush1.xpose.msra.mxu0 0.0
        %598 = vmatprep.subr.mxu0 0.0
        %599 = vmatpush1.xpose.msra.mxu0 0.0
        %600 = vmatprep.subr.mxu0 0.0
        %601 = vmatpush1.xpose.msra.mxu0 0.0
        %602 = vmatprep.subr.mxu0 0.0
        %603 = vmatpush1.xpose.msra.mxu0 0.0
        %604 = vmatprep.subr.mxu0 0.0
        %605 = vmatpush1.xpose.msra.mxu0 0.0
        %606 = vmatprep.subr.mxu0 0.0
        %607 = vmatpush1.xpose.msra.mxu0 0.0
        %608 = vmatprep.subr.mxu0 0.0
        %609 = vmatpush1.xpose.msra.mxu0 0.0
        %610 = vmatprep.mubr.f32.mxu0 0.0
        %611 = vmatmul.mubr.f32.gmra.mrb[0].mxu0 %v176
        %v612 = vpop.f32.mrb[0].mxu0
        %v613 = vadd.f32 0.0, %v612
        %v614 = vpop.f32.mrb[0].mxu0
        %615 = vdwg.mxu0
        %v617 = vsel %vm174, %v171, 0
        %619 = vmatprep.subr.mxu0 0.0
        %620 = vmatpush1.xpose.msra.mxu0 %v617
        %621 = vmatprep.subr.mxu0 0.0
        %622 = vmatpush1.xpose.msra.mxu0 0.0
        %623 = vmatprep.subr.mxu0 0.0
        %624 = vmatpush1.xpose.msra.mxu0 0.0
        %625 = vmatprep.subr.mxu0 0.0
        %626 = vmatpush1.xpose.msra.mxu0 0.0
        %627 = vmatprep.subr.mxu0 0.0
        %628 = vmatpush1.xpose.msra.mxu0 0.0
        %629 = vmatprep.subr.mxu0 0.0
        %630 = vmatpush1.xpose.msra.mxu0 0.0
        %631 = vmatprep.subr.mxu0 0.0
        %632 = vmatpush1.xpose.msra.mxu0 0.0
        %633 = vmatprep.subr.mxu0 0.0
        %634 = vmatpush1.xpose.msra.mxu0 0.0
        %635 = vmatprep.subr.mxu0 0.0
        %636 = vmatpush1.xpose.msra.mxu0 0.0
        %637 = vmatprep.subr.mxu0 0.0
        %638 = vmatpush1.xpose.msra.mxu0 0.0
        %639 = vmatprep.subr.mxu0 0.0
        %640 = vmatpush1.xpose.msra.mxu0 0.0
        %641 = vmatprep.subr.mxu0 0.0
        %642 = vmatpush1.xpose.msra.mxu0 0.0
        %643 = vmatprep.subr.mxu0 0.0
        %644 = vmatpush1.xpose.msra.mxu0 0.0
        %645 = vmatprep.subr.mxu0 0.0
        %646 = vmatpush1.xpose.msra.mxu0 0.0
        %647 = vmatprep.subr.mxu0 0.0
        %648 = vmatpush1.xpose.msra.mxu0 0.0
        %649 = vmatprep.subr.mxu0 0.0
        %650 = vmatpush1.xpose.msra.mxu0 0.0
        %651 = vmatprep.subr.mxu0 0.0
        %652 = vmatpush1.xpose.msra.mxu0 0.0
        %653 = vmatprep.subr.mxu0 0.0
        %654 = vmatpush1.xpose.msra.mxu0 0.0
        %655 = vmatprep.subr.mxu0 0.0
        %656 = vmatpush1.xpose.msra.mxu0 0.0
        %657 = vmatprep.subr.mxu0 0.0
        %658 = vmatpush1.xpose.msra.mxu0 0.0
        %659 = vmatprep.subr.mxu0 0.0
        %660 = vmatpush1.xpose.msra.mxu0 0.0
        %661 = vmatprep.subr.mxu0 0.0
        %662 = vmatpush1.xpose.msra.mxu0 0.0
        %663 = vmatprep.subr.mxu0 0.0
        %664 = vmatpush1.xpose.msra.mxu0 0.0
        %665 = vmatprep.subr.mxu0 0.0
        %666 = vmatpush1.xpose.msra.mxu0 0.0
        %667 = vmatprep.subr.mxu0 0.0
        %668 = vmatpush1.xpose.msra.mxu0 0.0
        %669 = vmatprep.subr.mxu0 0.0
        %670 = vmatpush1.xpose.msra.mxu0 0.0
        %671 = vmatprep.subr.mxu0 0.0
        %672 = vmatpush1.xpose.msra.mxu0 0.0
        %673 = vmatprep.subr.mxu0 0.0
        %674 = vmatpush1.xpose.msra.mxu0 0.0
        %675 = vmatprep.subr.mxu0 0.0
        %676 = vmatpush1.xpose.msra.mxu0 0.0
        %677 = vmatprep.subr.mxu0 0.0
        %678 = vmatpush1.xpose.msra.mxu0 0.0
        %679 = vmatprep.subr.mxu0 0.0
        %680 = vmatpush1.xpose.msra.mxu0 0.0
        %681 = vmatprep.subr.mxu0 0.0
        %682 = vmatpush1.xpose.msra.mxu0 0.0
        %683 = vmatprep.mubr.f32.mxu0 0.0
        %684 = vmatmul.mubr.f32.gmra.mrb[0].mxu0 %v176
        %v685 = vpop.f32.mrb[0].mxu0
        %v686 = vadd.f32 0.0, %v685
        %v687 = vpop.f32.mrb[0].mxu0
        %688 = vdwg.mxu0
        %v690 = vsel %vm174, %v172, 0
        %692 = vmatprep.subr.mxu0 0.0
        %693 = vmatpush1.xpose.msra.mxu0 %v690
        %694 = vmatprep.subr.mxu0 0.0
        %695 = vmatpush1.xpose.msra.mxu0 0.0
        %696 = vmatprep.subr.mxu0 0.0
        %697 = vmatpush1.xpose.msra.mxu0 0.0
        %698 = vmatprep.subr.mxu0 0.0
        %699 = vmatpush1.xpose.msra.mxu0 0.0
        %700 = vmatprep.subr.mxu0 0.0
        %701 = vmatpush1.xpose.msra.mxu0 0.0
        %702 = vmatprep.subr.mxu0 0.0
        %703 = vmatpush1.xpose.msra.mxu0 0.0
        %704 = vmatprep.subr.mxu0 0.0
        %705 = vmatpush1.xpose.msra.mxu0 0.0
        %706 = vmatprep.subr.mxu0 0.0
        %707 = vmatpush1.xpose.msra.mxu0 0.0
        %708 = vmatprep.subr.mxu0 0.0
        %709 = vmatpush1.xpose.msra.mxu0 0.0
        %710 = vmatprep.subr.mxu0 0.0
        %711 = vmatpush1.xpose.msra.mxu0 0.0
        %712 = vmatprep.subr.mxu0 0.0
        %713 = vmatpush1.xpose.msra.mxu0 0.0
        %714 = vmatprep.subr.mxu0 0.0
        %715 = vmatpush1.xpose.msra.mxu0 0.0
        %716 = vmatprep.subr.mxu0 0.0
        %717 = vmatpush1.xpose.msra.mxu0 0.0
        %718 = vmatprep.subr.mxu0 0.0
        %719 = vmatpush1.xpose.msra.mxu0 0.0
        %720 = vmatprep.subr.mxu0 0.0
        %721 = vmatpush1.xpose.msra.mxu0 0.0
        %722 = vmatprep.subr.mxu0 0.0
        %723 = vmatpush1.xpose.msra.mxu0 0.0
        %724 = vmatprep.subr.mxu0 0.0
        %725 = vmatpush1.xpose.msra.mxu0 0.0
        %726 = vmatprep.subr.mxu0 0.0
        %727 = vmatpush1.xpose.msra.mxu0 0.0
        %728 = vmatprep.subr.mxu0 0.0
        %729 = vmatpush1.xpose.msra.mxu0 0.0
        %730 = vmatprep.subr.mxu0 0.0
        %731 = vmatpush1.xpose.msra.mxu0 0.0
        %732 = vmatprep.subr.mxu0 0.0
        %733 = vmatpush1.xpose.msra.mxu0 0.0
        %734 = vmatprep.subr.mxu0 0.0
        %735 = vmatpush1.xpose.msra.mxu0 0.0
        %736 = vmatprep.subr.mxu0 0.0
        %737 = vmatpush1.xpose.msra.mxu0 0.0
        %738 = vmatprep.subr.mxu0 0.0
        %739 = vmatpush1.xpose.msra.mxu0 0.0
        %740 = vmatprep.subr.mxu0 0.0
        %741 = vmatpush1.xpose.msra.mxu0 0.0
        %742 = vmatprep.subr.mxu0 0.0
        %743 = vmatpush1.xpose.msra.mxu0 0.0
        %744 = vmatprep.subr.mxu0 0.0
        %745 = vmatpush1.xpose.msra.mxu0 0.0
        %746 = vmatprep.subr.mxu0 0.0
        %747 = vmatpush1.xpose.msra.mxu0 0.0
        %748 = vmatprep.subr.mxu0 0.0
        %749 = vmatpush1.xpose.msra.mxu0 0.0
        %750 = vmatprep.subr.mxu0 0.0
        %751 = vmatpush1.xpose.msra.mxu0 0.0
        %752 = vmatprep.subr.mxu0 0.0
        %753 = vmatpush1.xpose.msra.mxu0 0.0
        %754 = vmatprep.subr.mxu0 0.0
        %755 = vmatpush1.xpose.msra.mxu0 0.0
        %756 = vmatprep.mubr.f32.mxu0 0.0
        %757 = vmatmul.mubr.f32.gmra.mrb[0].mxu0 %v176
        %v758 = vpop.f32.mrb[0].mxu0
        %v759 = vadd.f32 0.0, %v758
        %v760 = vpop.f32.mrb[0].mxu0
        %761 = vdwg.mxu0
        %s762 = sld [smem:[#allocation3]]
        %v763 = vlaneseq
        %v764 = vand.u32 %v763, 127
        %v765 = vstv %s762
        %vm766 = vcmp.eq.s32.totalorder %v764, %v765
        %v767 = vsel %vm766, -1e+30, %v248
        %v768 = vsel %vm766, -1e+30, %v321
        %v769 = vsel %vm766, -1e+30, %v394
        %v770 = vsel %vm766, -1e+30, %v467
        %v771 = vsel %vm766, -1e+30, %v540
        %v772 = vsel %vm766, -1e+30, %v613
        %v773 = vsel %vm766, -1e+30, %v686
        %v774 = vsel %vm766, -1e+30, %v759
        %vm775 = vcmask 57344
        %v776 = vsel %vm775, %v767, -inf
        %777 = vmax.xlane.f32.xlu0 %v776
        %v778 = vpop.xlane.xlu0 %777
        %v779 = vsel %vm775, %v768, -inf
        %780 = vmax.xlane.f32.xlu0 %v779
        %v781 = vpop.xlane.xlu0 %780
        %v782 = vsel %vm775, %v769, -inf
        %783 = vmax.xlane.f32.xlu0 %v782
        %v784 = vpop.xlane.xlu0 %783
        %v785 = vsel %vm775, %v770, -inf
        %786 = vmax.xlane.f32.xlu0 %v785
        %v787 = vpop.xlane.xlu0 %786
        %v788 = vsel %vm775, %v771, -inf
        %789 = vmax.xlane.f32.xlu0 %v788
        %v790 = vpop.xlane.xlu0 %789
        %v791 = vsel %vm775, %v772, -inf
        %792 = vmax.xlane.f32.xlu0 %v791
        %v793 = vpop.xlane.xlu0 %792
        %v794 = vsel %vm775, %v773, -inf
        %795 = vmax.xlane.f32.xlu0 %v794
        %v796 = vpop.xlane.xlu0 %795
        %v797 = vsel %vm775, %v774, -inf
        %798 = vmax.xlane.f32.xlu0 %v797
        %v799 = vpop.xlane.xlu0 %798
        %v800 = vsub.f32 %v767, %v778
        %v801 = vsub.f32 %v768, %v781
        %v802 = vsub.f32 %v769, %v784
        %v803 = vsub.f32 %v770, %v787
        %v804 = vsub.f32 %v771, %v790
        %v805 = vsub.f32 %v772, %v793
        %v806 = vsub.f32 %v773, %v796
        %v807 = vsub.f32 %v774, %v799
        %v808 = vmul.f32 %v800, 1.442695
        %v809 = vpow.pop %v808
        %v810 = vmul.f32 %v801, 1.442695
        %v811 = vpow.pop %v810
        %v812 = vmul.f32 %v802, 1.442695
        %v813 = vpow.pop %v812
        %v814 = vmul.f32 %v803, 1.442695
        %v815 = vpow.pop %v814
        %v816 = vmul.f32 %v804, 1.442695
        %v817 = vpow.pop %v816
        %v818 = vmul.f32 %v805, 1.442695
        %v819 = vpow.pop %v818
        %v820 = vmul.f32 %v806, 1.442695
        %v821 = vpow.pop %v820
        %v822 = vmul.f32 %v807, 1.442695
        %v823 = vpow.pop %v822
        %v824 = vsel %vm775, %v809, 0.0
        %825 = vadd.xlane.f32.xlu0 %v824
        %v826 = vpop.xlane.xlu0 %825
        %v827 = vsel %vm775, %v811, 0.0
        %828 = vadd.xlane.f32.xlu0 %v827
        %v829 = vpop.xlane.xlu0 %828
        %v830 = vsel %vm775, %v813, 0.0
        %831 = vadd.xlane.f32.xlu0 %v830
        %v832 = vpop.xlane.xlu0 %831
        %v833 = vsel %vm775, %v815, 0.0
        %834 = vadd.xlane.f32.xlu0 %v833
        %v835 = vpop.xlane.xlu0 %834
        %v836 = vsel %vm775, %v817, 0.0
        %837 = vadd.xlane.f32.xlu0 %v836
        %v838 = vpop.xlane.xlu0 %837
        %v839 = vsel %vm775, %v819, 0.0
        %840 = vadd.xlane.f32.xlu0 %v839
        %v841 = vpop.xlane.xlu0 %840
        %v842 = vsel %vm775, %v821, 0.0
        %843 = vadd.xlane.f32.xlu0 %v842
        %v844 = vpop.xlane.xlu0 %843
        %v845 = vsel %vm775, %v823, 0.0
        %846 = vadd.xlane.f32.xlu0 %v845
        %v847 = vpop.xlane.xlu0 %846
        %v848 = vrcp.pop %v826
        %v849 = vrcp.pop %v829
        %v850 = vrcp.pop %v832
        %v851 = vrcp.pop %v835
        %v852 = vrcp.pop %v838
        %v853 = vrcp.pop %v841
        %v854 = vrcp.pop %v844
        %v855 = vrcp.pop %v847
        %v856 = vmul.f32 %v809, %v848
        %v857 = vmul.f32 %v811, %v849
        %v858 = vmul.f32 %v813, %v850
        %v859 = vmul.f32 %v815, %v851
        %v860 = vmul.f32 %v817, %v852
        %v861 = vmul.f32 %v819, %v853
        %v862 = vmul.f32 %v821, %v854
        %v863 = vmul.f32 %v823, %v855
        %vm864 = vcmask 64512
        %v866 = vsel %vm864, %v856, 0
        %868 = vmatprep.subr.mxu0 0.0
        %869 = vmatpush1.msra.mxu0 %v165
        %870 = vmatprep.subr.mxu0 0.0
        %871 = vmatpush1.msra.mxu0 0.0
        %872 = vmatprep.subr.mxu0 0.0
        %873 = vmatpush1.msra.mxu0 0.0
        %874 = vmatprep.subr.mxu0 0.0
        %875 = vmatpush1.msra.mxu0 0.0
        %876 = vmatprep.subr.mxu0 0.0
        %877 = vmatpush1.msra.mxu0 0.0
        %878 = vmatprep.subr.mxu0 0.0
        %879 = vmatpush1.msra.mxu0 0.0
        %880 = vmatprep.subr.mxu0 0.0
        %881 = vmatpush1.msra.mxu0 0.0
        %882 = vmatprep.subr.mxu0 0.0
        %883 = vmatpush1.msra.mxu0 0.0
        %884 = vmatprep.subr.mxu0 0.0
        %885 = vmatpush1.msra.mxu0 0.0
        %886 = vmatprep.subr.mxu0 0.0
        %887 = vmatpush1.msra.mxu0 0.0
        %888 = vmatprep.subr.mxu0 0.0
        %889 = vmatpush1.msra.mxu0 0.0
        %890 = vmatprep.subr.mxu0 0.0
        %891 = vmatpush1.msra.mxu0 0.0
        %892 = vmatprep.subr.mxu0 0.0
        %893 = vmatpush1.msra.mxu0 0.0
        %894 = vmatprep.subr.mxu0 0.0
        %895 = vmatpush1.msra.mxu0 0.0
        %896 = vmatprep.subr.mxu0 0.0
        %897 = vmatpush1.msra.mxu0 0.0
        %898 = vmatprep.subr.mxu0 0.0
        %899 = vmatpush1.msra.mxu0 0.0
        %900 = vmatprep.subr.mxu0 0.0
        %901 = vmatpush1.msra.mxu0 0.0
        %902 = vmatprep.subr.mxu0 0.0
        %903 = vmatpush1.msra.mxu0 0.0
        %904 = vmatprep.subr.mxu0 0.0
        %905 = vmatpush1.msra.mxu0 0.0
        %906 = vmatprep.subr.mxu0 0.0
        %907 = vmatpush1.msra.mxu0 0.0
        %908 = vmatprep.subr.mxu0 0.0
        %909 = vmatpush1.msra.mxu0 0.0
        %910 = vmatprep.subr.mxu0 0.0
        %911 = vmatpush1.msra.mxu0 0.0
        %912 = vmatprep.subr.mxu0 0.0
        %913 = vmatpush1.msra.mxu0 0.0
        %914 = vmatprep.subr.mxu0 0.0
        %915 = vmatpush1.msra.mxu0 0.0
        %916 = vmatprep.subr.mxu0 0.0
        %917 = vmatpush1.msra.mxu0 0.0
        %918 = vmatprep.subr.mxu0 0.0
        %919 = vmatpush1.msra.mxu0 0.0
        %920 = vmatprep.subr.mxu0 0.0
        %921 = vmatpush1.msra.mxu0 0.0
        %922 = vmatprep.subr.mxu0 0.0
        %923 = vmatpush1.msra.mxu0 0.0
        %924 = vmatprep.subr.mxu0 0.0
        %925 = vmatpush1.msra.mxu0 0.0
        %926 = vmatprep.subr.mxu0 0.0
        %927 = vmatpush1.msra.mxu0 0.0
        %928 = vmatprep.subr.mxu0 0.0
        %929 = vmatpush1.msra.mxu0 0.0
        %930 = vmatprep.subr.mxu0 0.0
        %931 = vmatpush1.msra.mxu0 0.0
        %932 = vmatprep.mubr.f32.mxu0 0.0
        %933 = vmatmul.mubr.f32.gmra.mrb[0].mxu0 %v866
        %v934 = vpop.f32.mrb[0].mxu0
        %v935 = vadd.f32 0.0, %v934
        %v936 = vpop.f32.mrb[0].mxu0
        %937 = vdwg.mxu0
        %v939 = vsel %vm864, %v857, 0
        %941 = vmatprep.subr.mxu0 0.0
        %942 = vmatpush1.msra.mxu0 %v166
        %943 = vmatprep.subr.mxu0 0.0
        %944 = vmatpush1.msra.mxu0 0.0
        %945 = vmatprep.subr.mxu0 0.0
        %946 = vmatpush1.msra.mxu0 0.0
        %947 = vmatprep.subr.mxu0 0.0
        %948 = vmatpush1.msra.mxu0 0.0
        %949 = vmatprep.subr.mxu0 0.0
        %950 = vmatpush1.msra.mxu0 0.0
        %951 = vmatprep.subr.mxu0 0.0
        %952 = vmatpush1.msra.mxu0 0.0
        %953 = vmatprep.subr.mxu0 0.0
        %954 = vmatpush1.msra.mxu0 0.0
        %955 = vmatprep.subr.mxu0 0.0
        %956 = vmatpush1.msra.mxu0 0.0
        %957 = vmatprep.subr.mxu0 0.0
        %958 = vmatpush1.msra.mxu0 0.0
        %959 = vmatprep.subr.mxu0 0.0
        %960 = vmatpush1.msra.mxu0 0.0
        %961 = vmatprep.subr.mxu0 0.0
        %962 = vmatpush1.msra.mxu0 0.0
        %963 = vmatprep.subr.mxu0 0.0
        %964 = vmatpush1.msra.mxu0 0.0
        %965 = vmatprep.subr.mxu0 0.0
        %966 = vmatpush1.msra.mxu0 0.0
        %967 = vmatprep.subr.mxu0 0.0
        %968 = vmatpush1.msra.mxu0 0.0
        %969 = vmatprep.subr.mxu0 0.0
        %970 = vmatpush1.msra.mxu0 0.0
        %971 = vmatprep.subr.mxu0 0.0
        %972 = vmatpush1.msra.mxu0 0.0
        %973 = vmatprep.subr.mxu0 0.0
        %974 = vmatpush1.msra.mxu0 0.0
        %975 = vmatprep.subr.mxu0 0.0
        %976 = vmatpush1.msra.mxu0 0.0
        %977 = vmatprep.subr.mxu0 0.0
        %978 = vmatpush1.msra.mxu0 0.0
        %979 = vmatprep.subr.mxu0 0.0
        %980 = vmatpush1.msra.mxu0 0.0
        %981 = vmatprep.subr.mxu0 0.0
        %982 = vmatpush1.msra.mxu0 0.0
        %983 = vmatprep.subr.mxu0 0.0
        %984 = vmatpush1.msra.mxu0 0.0
        %985 = vmatprep.subr.mxu0 0.0
        %986 = vmatpush1.msra.mxu0 0.0
        %987 = vmatprep.subr.mxu0 0.0
        %988 = vmatpush1.msra.mxu0 0.0
        %989 = vmatprep.subr.mxu0 0.0
        %990 = vmatpush1.msra.mxu0 0.0
        %991 = vmatprep.subr.mxu0 0.0
        %992 = vmatpush1.msra.mxu0 0.0
        %993 = vmatprep.subr.mxu0 0.0
        %994 = vmatpush1.msra.mxu0 0.0
        %995 = vmatprep.subr.mxu0 0.0
        %996 = vmatpush1.msra.mxu0 0.0
        %997 = vmatprep.subr.mxu0 0.0
        %998 = vmatpush1.msra.mxu0 0.0
        %999 = vmatprep.subr.mxu0 0.0
        %1000 = vmatpush1.msra.mxu0 0.0
        %1001 = vmatprep.subr.mxu0 0.0
        %1002 = vmatpush1.msra.mxu0 0.0
        %1003 = vmatprep.subr.mxu0 0.0
        %1004 = vmatpush1.msra.mxu0 0.0
        %1005 = vmatprep.mubr.f32.mxu0 0.0
        %1006 = vmatmul.mubr.f32.gmra.mrb[0].mxu0 %v939
        %v1007 = vpop.f32.mrb[0].mxu0
        %v1008 = vadd.f32 0.0, %v1007
        %v1009 = vpop.f32.mrb[0].mxu0
        %1010 = vdwg.mxu0
        %v1012 = vsel %vm864, %v858, 0
        %1014 = vmatprep.subr.mxu0 0.0
        %1015 = vmatpush1.msra.mxu0 %v167
        %1016 = vmatprep.subr.mxu0 0.0
        %1017 = vmatpush1.msra.mxu0 0.0
        %1018 = vmatprep.subr.mxu0 0.0
        %1019 = vmatpush1.msra.mxu0 0.0
        %1020 = vmatprep.subr.mxu0 0.0
        %1021 = vmatpush1.msra.mxu0 0.0
        %1022 = vmatprep.subr.mxu0 0.0
        %1023 = vmatpush1.msra.mxu0 0.0
        %1024 = vmatprep.subr.mxu0 0.0
        %1025 = vmatpush1.msra.mxu0 0.0
        %1026 = vmatprep.subr.mxu0 0.0
        %1027 = vmatpush1.msra.mxu0 0.0
        %1028 = vmatprep.subr.mxu0 0.0
        %1029 = vmatpush1.msra.mxu0 0.0
        %1030 = vmatprep.subr.mxu0 0.0
        %1031 = vmatpush1.msra.mxu0 0.0
        %1032 = vmatprep.subr.mxu0 0.0
        %1033 = vmatpush1.msra.mxu0 0.0
        %1034 = vmatprep.subr.mxu0 0.0
        %1035 = vmatpush1.msra.mxu0 0.0
        %1036 = vmatprep.subr.mxu0 0.0
        %1037 = vmatpush1.msra.mxu0 0.0
        %1038 = vmatprep.subr.mxu0 0.0
        %1039 = vmatpush1.msra.mxu0 0.0
        %1040 = vmatprep.subr.mxu0 0.0
        %1041 = vmatpush1.msra.mxu0 0.0
        %1042 = vmatprep.subr.mxu0 0.0
        %1043 = vmatpush1.msra.mxu0 0.0
        %1044 = vmatprep.subr.mxu0 0.0
        %1045 = vmatpush1.msra.mxu0 0.0
        %1046 = vmatprep.subr.mxu0 0.0
        %1047 = vmatpush1.msra.mxu0 0.0
        %1048 = vmatprep.subr.mxu0 0.0
        %1049 = vmatpush1.msra.mxu0 0.0
        %1050 = vmatprep.subr.mxu0 0.0
        %1051 = vmatpush1.msra.mxu0 0.0
        %1052 = vmatprep.subr.mxu0 0.0
        %1053 = vmatpush1.msra.mxu0 0.0
        %1054 = vmatprep.subr.mxu0 0.0
        %1055 = vmatpush1.msra.mxu0 0.0
        %1056 = vmatprep.subr.mxu0 0.0
        %1057 = vmatpush1.msra.mxu0 0.0
        %1058 = vmatprep.subr.mxu0 0.0
        %1059 = vmatpush1.msra.mxu0 0.0
        %1060 = vmatprep.subr.mxu0 0.0
        %1061 = vmatpush1.msra.mxu0 0.0
        %1062 = vmatprep.subr.mxu0 0.0
        %1063 = vmatpush1.msra.mxu0 0.0
        %1064 = vmatprep.subr.mxu0 0.0
        %1065 = vmatpush1.msra.mxu0 0.0
        %1066 = vmatprep.subr.mxu0 0.0
        %1067 = vmatpush1.msra.mxu0 0.0
        %1068 = vmatprep.subr.mxu0 0.0
        %1069 = vmatpush1.msra.mxu0 0.0
        %1070 = vmatprep.subr.mxu0 0.0
        %1071 = vmatpush1.msra.mxu0 0.0
        %1072 = vmatprep.subr.mxu0 0.0
        %1073 = vmatpush1.msra.mxu0 0.0
        %1074 = vmatprep.subr.mxu0 0.0
        %1075 = vmatpush1.msra.mxu0 0.0
        %1076 = vmatprep.subr.mxu0 0.0
        %1077 = vmatpush1.msra.mxu0 0.0
        %1078 = vmatprep.mubr.f32.mxu0 0.0
        %1079 = vmatmul.mubr.f32.gmra.mrb[0].mxu0 %v1012
        %v1080 = vpop.f32.mrb[0].mxu0
        %v1081 = vadd.f32 0.0, %v1080
        %v1082 = vpop.f32.mrb[0].mxu0
        %1083 = vdwg.mxu0
        %v1085 = vsel %vm864, %v859, 0
        %1087 = vmatprep.subr.mxu0 0.0
        %1088 = vmatpush1.msra.mxu0 %v168
        %1089 = vmatprep.subr.mxu0 0.0
        %1090 = vmatpush1.msra.mxu0 0.0
        %1091 = vmatprep.subr.mxu0 0.0
        %1092 = vmatpush1.msra.mxu0 0.0
        %1093 = vmatprep.subr.mxu0 0.0
        %1094 = vmatpush1.msra.mxu0 0.0
        %1095 = vmatprep.subr.mxu0 0.0
        %1096 = vmatpush1.msra.mxu0 0.0
        %1097 = vmatprep.subr.mxu0 0.0
        %1098 = vmatpush1.msra.mxu0 0.0
        %1099 = vmatprep.subr.mxu0 0.0
        %1100 = vmatpush1.msra.mxu0 0.0
        %1101 = vmatprep.subr.mxu0 0.0
        %1102 = vmatpush1.msra.mxu0 0.0
        %1103 = vmatprep.subr.mxu0 0.0
        %1104 = vmatpush1.msra.mxu0 0.0
        %1105 = vmatprep.subr.mxu0 0.0
        %1106 = vmatpush1.msra.mxu0 0.0
        %1107 = vmatprep.subr.mxu0 0.0
        %1108 = vmatpush1.msra.mxu0 0.0
        %1109 = vmatprep.subr.mxu0 0.0
        %1110 = vmatpush1.msra.mxu0 0.0
        %1111 = vmatprep.subr.mxu0 0.0
        %1112 = vmatpush1.msra.mxu0 0.0
        %1113 = vmatprep.subr.mxu0 0.0
        %1114 = vmatpush1.msra.mxu0 0.0
        %1115 = vmatprep.subr.mxu0 0.0
        %1116 = vmatpush1.msra.mxu0 0.0
        %1117 = vmatprep.subr.mxu0 0.0
        %1118 = vmatpush1.msra.mxu0 0.0
        %1119 = vmatprep.subr.mxu0 0.0
        %1120 = vmatpush1.msra.mxu0 0.0
        %1121 = vmatprep.subr.mxu0 0.0
        %1122 = vmatpush1.msra.mxu0 0.0
        %1123 = vmatprep.subr.mxu0 0.0
        %1124 = vmatpush1.msra.mxu0 0.0
        %1125 = vmatprep.subr.mxu0 0.0
        %1126 = vmatpush1.msra.mxu0 0.0
        %1127 = vmatprep.subr.mxu0 0.0
        %1128 = vmatpush1.msra.mxu0 0.0
        %1129 = vmatprep.subr.mxu0 0.0
        %1130 = vmatpush1.msra.mxu0 0.0
        %1131 = vmatprep.subr.mxu0 0.0
        %1132 = vmatpush1.msra.mxu0 0.0
        %1133 = vmatprep.subr.mxu0 0.0
        %1134 = vmatpush1.msra.mxu0 0.0
        %1135 = vmatprep.subr.mxu0 0.0
        %1136 = vmatpush1.msra.mxu0 0.0
        %1137 = vmatprep.subr.mxu0 0.0
        %1138 = vmatpush1.msra.mxu0 0.0
        %1139 = vmatprep.subr.mxu0 0.0
        %1140 = vmatpush1.msra.mxu0 0.0
        %1141 = vmatprep.subr.mxu0 0.0
        %1142 = vmatpush1.msra.mxu0 0.0
        %1143 = vmatprep.subr.mxu0 0.0
        %1144 = vmatpush1.msra.mxu0 0.0
        %1145 = vmatprep.subr.mxu0 0.0
        %1146 = vmatpush1.msra.mxu0 0.0
        %1147 = vmatprep.subr.mxu0 0.0
        %1148 = vmatpush1.msra.mxu0 0.0
        %1149 = vmatprep.subr.mxu0 0.0
        %1150 = vmatpush1.msra.mxu0 0.0
        %1151 = vmatprep.mubr.f32.mxu0 0.0
        %1152 = vmatmul.mubr.f32.gmra.mrb[0].mxu0 %v1085
        %v1153 = vpop.f32.mrb[0].mxu0
        %v1154 = vadd.f32 0.0, %v1153
        %v1155 = vpop.f32.mrb[0].mxu0
        %1156 = vdwg.mxu0
        %v1158 = vsel %vm864, %v860, 0
        %1160 = vmatprep.subr.mxu0 0.0
        %1161 = vmatpush1.msra.mxu0 %v169
        %1162 = vmatprep.subr.mxu0 0.0
        %1163 = vmatpush1.msra.mxu0 0.0
        %1164 = vmatprep.subr.mxu0 0.0
        %1165 = vmatpush1.msra.mxu0 0.0
        %1166 = vmatprep.subr.mxu0 0.0
        %1167 = vmatpush1.msra.mxu0 0.0
        %1168 = vmatprep.subr.mxu0 0.0
        %1169 = vmatpush1.msra.mxu0 0.0
        %1170 = vmatprep.subr.mxu0 0.0
        %1171 = vmatpush1.msra.mxu0 0.0
        %1172 = vmatprep.subr.mxu0 0.0
        %1173 = vmatpush1.msra.mxu0 0.0
        %1174 = vmatprep.subr.mxu0 0.0
        %1175 = vmatpush1.msra.mxu0 0.0
        %1176 = vmatprep.subr.mxu0 0.0
        %1177 = vmatpush1.msra.mxu0 0.0
        %1178 = vmatprep.subr.mxu0 0.0
        %1179 = vmatpush1.msra.mxu0 0.0
        %1180 = vmatprep.subr.mxu0 0.0
        %1181 = vmatpush1.msra.mxu0 0.0
        %1182 = vmatprep.subr.mxu0 0.0
        %1183 = vmatpush1.msra.mxu0 0.0
        %1184 = vmatprep.subr.mxu0 0.0
        %1185 = vmatpush1.msra.mxu0 0.0
        %1186 = vmatprep.subr.mxu0 0.0
        %1187 = vmatpush1.msra.mxu0 0.0
        %1188 = vmatprep.subr.mxu0 0.0
        %1189 = vmatpush1.msra.mxu0 0.0
        %1190 = vmatprep.subr.mxu0 0.0
        %1191 = vmatpush1.msra.mxu0 0.0
        %1192 = vmatprep.subr.mxu0 0.0
        %1193 = vmatpush1.msra.mxu0 0.0
        %1194 = vmatprep.subr.mxu0 0.0
        %1195 = vmatpush1.msra.mxu0 0.0
        %1196 = vmatprep.subr.mxu0 0.0
        %1197 = vmatpush1.msra.mxu0 0.0
        %1198 = vmatprep.subr.mxu0 0.0
        %1199 = vmatpush1.msra.mxu0 0.0
        %1200 = vmatprep.subr.mxu0 0.0
        %1201 = vmatpush1.msra.mxu0 0.0
        %1202 = vmatprep.subr.mxu0 0.0
        %1203 = vmatpush1.msra.mxu0 0.0
        %1204 = vmatprep.subr.mxu0 0.0
        %1205 = vmatpush1.msra.mxu0 0.0
        %1206 = vmatprep.subr.mxu0 0.0
        %1207 = vmatpush1.msra.mxu0 0.0
        %1208 = vmatprep.subr.mxu0 0.0
        %1209 = vmatpush1.msra.mxu0 0.0
        %1210 = vmatprep.subr.mxu0 0.0
        %1211 = vmatpush1.msra.mxu0 0.0
        %1212 = vmatprep.subr.mxu0 0.0
        %1213 = vmatpush1.msra.mxu0 0.0
        %1214 = vmatprep.subr.mxu0 0.0
        %1215 = vmatpush1.msra.mxu0 0.0
        %1216 = vmatprep.subr.mxu0 0.0
        %1217 = vmatpush1.msra.mxu0 0.0
        %1218 = vmatprep.subr.mxu0 0.0
        %1219 = vmatpush1.msra.mxu0 0.0
        %1220 = vmatprep.subr.mxu0 0.0
        %1221 = vmatpush1.msra.mxu0 0.0
        %1222 = vmatprep.subr.mxu0 0.0
        %1223 = vmatpush1.msra.mxu0 0.0
        %1224 = vmatprep.mubr.f32.mxu0 0.0
        %1225 = vmatmul.mubr.f32.gmra.mrb[0].mxu0 %v1158
        %v1226 = vpop.f32.mrb[0].mxu0
        %v1227 = vadd.f32 0.0, %v1226
        %v1228 = vpop.f32.mrb[0].mxu0
        %1229 = vdwg.mxu0
        %v1231 = vsel %vm864, %v861, 0
        %1233 = vmatprep.subr.mxu0 0.0
        %1234 = vmatpush1.msra.mxu0 %v170
        %1235 = vmatprep.subr.mxu0 0.0
        %1236 = vmatpush1.msra.mxu0 0.0
        %1237 = vmatprep.subr.mxu0 0.0
        %1238 = vmatpush1.msra.mxu0 0.0
        %1239 = vmatprep.subr.mxu0 0.0
        %1240 = vmatpush1.msra.mxu0 0.0
        %1241 = vmatprep.subr.mxu0 0.0
        %1242 = vmatpush1.msra.mxu0 0.0
        %1243 = vmatprep.subr.mxu0 0.0
        %1244 = vmatpush1.msra.mxu0 0.0
        %1245 = vmatprep.subr.mxu0 0.0
        %1246 = vmatpush1.msra.mxu0 0.0
        %1247 = vmatprep.subr.mxu0 0.0
        %1248 = vmatpush1.msra.mxu0 0.0
        %1249 = vmatprep.subr.mxu0 0.0
        %1250 = vmatpush1.msra.mxu0 0.0
        %1251 = vmatprep.subr.mxu0 0.0
        %1252 = vmatpush1.msra.mxu0 0.0
        %1253 = vmatprep.subr.mxu0 0.0
        %1254 = vmatpush1.msra.mxu0 0.0
        %1255 = vmatprep.subr.mxu0 0.0
        %1256 = vmatpush1.msra.mxu0 0.0
        %1257 = vmatprep.subr.mxu0 0.0
        %1258 = vmatpush1.msra.mxu0 0.0
        %1259 = vmatprep.subr.mxu0 0.0
        %1260 = vmatpush1.msra.mxu0 0.0
        %1261 = vmatprep.subr.mxu0 0.0
        %1262 = vmatpush1.msra.mxu0 0.0
        %1263 = vmatprep.subr.mxu0 0.0
        %1264 = vmatpush1.msra.mxu0 0.0
        %1265 = vmatprep.subr.mxu0 0.0
        %1266 = vmatpush1.msra.mxu0 0.0
        %1267 = vmatprep.subr.mxu0 0.0
        %1268 = vmatpush1.msra.mxu0 0.0
        %1269 = vmatprep.subr.mxu0 0.0
        %1270 = vmatpush1.msra.mxu0 0.0
        %1271 = vmatprep.subr.mxu0 0.0
        %1272 = vmatpush1.msra.mxu0 0.0
        %1273 = vmatprep.subr.mxu0 0.0
        %1274 = vmatpush1.msra.mxu0 0.0
        %1275 = vmatprep.subr.mxu0 0.0
        %1276 = vmatpush1.msra.mxu0 0.0
        %1277 = vmatprep.subr.mxu0 0.0
        %1278 = vmatpush1.msra.mxu0 0.0
        %1279 = vmatprep.subr.mxu0 0.0
        %1280 = vmatpush1.msra.mxu0 0.0
        %1281 = vmatprep.subr.mxu0 0.0
        %1282 = vmatpush1.msra.mxu0 0.0
        %1283 = vmatprep.subr.mxu0 0.0
        %1284 = vmatpush1.msra.mxu0 0.0
        %1285 = vmatprep.subr.mxu0 0.0
        %1286 = vmatpush1.msra.mxu0 0.0
        %1287 = vmatprep.subr.mxu0 0.0
        %1288 = vmatpush1.msra.mxu0 0.0
        %1289 = vmatprep.subr.mxu0 0.0
        %1290 = vmatpush1.msra.mxu0 0.0
        %1291 = vmatprep.subr.mxu0 0.0
        %1292 = vmatpush1.msra.mxu0 0.0
        %1293 = vmatprep.subr.mxu0 0.0
        %1294 = vmatpush1.msra.mxu0 0.0
        %1295 = vmatprep.subr.mxu0 0.0
        %1296 = vmatpush1.msra.mxu0 0.0
        %1297 = vmatprep.mubr.f32.mxu0 0.0
        %1298 = vmatmul.mubr.f32.gmra.mrb[0].mxu0 %v1231
        %v1299 = vpop.f32.mrb[0].mxu0
        %v1300 = vadd.f32 0.0, %v1299
        %v1301 = vpop.f32.mrb[0].mxu0
        %1302 = vdwg.mxu0
        %v1304 = vsel %vm864, %v862, 0
        %1306 = vmatprep.subr.mxu0 0.0
        %1307 = vmatpush1.msra.mxu0 %v171
        %1308 = vmatprep.subr.mxu0 0.0
        %1309 = vmatpush1.msra.mxu0 0.0
        %1310 = vmatprep.subr.mxu0 0.0
        %1311 = vmatpush1.msra.mxu0 0.0
        %1312 = vmatprep.subr.mxu0 0.0
        %1313 = vmatpush1.msra.mxu0 0.0
        %1314 = vmatprep.subr.mxu0 0.0
        %1315 = vmatpush1.msra.mxu0 0.0
        %1316 = vmatprep.subr.mxu0 0.0
        %1317 = vmatpush1.msra.mxu0 0.0
        %1318 = vmatprep.subr.mxu0 0.0
        %1319 = vmatpush1.msra.mxu0 0.0
        %1320 = vmatprep.subr.mxu0 0.0
        %1321 = vmatpush1.msra.mxu0 0.0
        %1322 = vmatprep.subr.mxu0 0.0
        %1323 = vmatpush1.msra.mxu0 0.0
        %1324 = vmatprep.subr.mxu0 0.0
        %1325 = vmatpush1.msra.mxu0 0.0
        %1326 = vmatprep.subr.mxu0 0.0
        %1327 = vmatpush1.msra.mxu0 0.0
        %1328 = vmatprep.subr.mxu0 0.0
        %1329 = vmatpush1.msra.mxu0 0.0
        %1330 = vmatprep.subr.mxu0 0.0
        %1331 = vmatpush1.msra.mxu0 0.0
        %1332 = vmatprep.subr.mxu0 0.0
        %1333 = vmatpush1.msra.mxu0 0.0
        %1334 = vmatprep.subr.mxu0 0.0
        %1335 = vmatpush1.msra.mxu0 0.0
        %1336 = vmatprep.subr.mxu0 0.0
        %1337 = vmatpush1.msra.mxu0 0.0
        %1338 = vmatprep.subr.mxu0 0.0
        %1339 = vmatpush1.msra.mxu0 0.0
        %1340 = vmatprep.subr.mxu0 0.0
        %1341 = vmatpush1.msra.mxu0 0.0
        %1342 = vmatprep.subr.mxu0 0.0
        %1343 = vmatpush1.msra.mxu0 0.0
        %1344 = vmatprep.subr.mxu0 0.0
        %1345 = vmatpush1.msra.mxu0 0.0
        %1346 = vmatprep.subr.mxu0 0.0
        %1347 = vmatpush1.msra.mxu0 0.0
        %1348 = vmatprep.subr.mxu0 0.0
        %1349 = vmatpush1.msra.mxu0 0.0
        %1350 = vmatprep.subr.mxu0 0.0
        %1351 = vmatpush1.msra.mxu0 0.0
        %1352 = vmatprep.subr.mxu0 0.0
        %1353 = vmatpush1.msra.mxu0 0.0
        %1354 = vmatprep.subr.mxu0 0.0
        %1355 = vmatpush1.msra.mxu0 0.0
        %1356 = vmatprep.subr.mxu0 0.0
        %1357 = vmatpush1.msra.mxu0 0.0
        %1358 = vmatprep.subr.mxu0 0.0
        %1359 = vmatpush1.msra.mxu0 0.0
        %1360 = vmatprep.subr.mxu0 0.0
        %1361 = vmatpush1.msra.mxu0 0.0
        %1362 = vmatprep.subr.mxu0 0.0
        %1363 = vmatpush1.msra.mxu0 0.0
        %1364 = vmatprep.subr.mxu0 0.0
        %1365 = vmatpush1.msra.mxu0 0.0
        %1366 = vmatprep.subr.mxu0 0.0
        %1367 = vmatpush1.msra.mxu0 0.0
        %1368 = vmatprep.subr.mxu0 0.0
        %1369 = vmatpush1.msra.mxu0 0.0
        %1370 = vmatprep.mubr.f32.mxu0 0.0
        %1371 = vmatmul.mubr.f32.gmra.mrb[0].mxu0 %v1304
        %v1372 = vpop.f32.mrb[0].mxu0
        %v1373 = vadd.f32 0.0, %v1372
        %v1374 = vpop.f32.mrb[0].mxu0
        %1375 = vdwg.mxu0
        %v1377 = vsel %vm864, %v863, 0
        %1379 = vmatprep.subr.mxu0 0.0
        %1380 = vmatpush1.msra.mxu0 %v172
        %1381 = vmatprep.subr.mxu0 0.0
        %1382 = vmatpush1.msra.mxu0 0.0
        %1383 = vmatprep.subr.mxu0 0.0
        %1384 = vmatpush1.msra.mxu0 0.0
        %1385 = vmatprep.subr.mxu0 0.0
        %1386 = vmatpush1.msra.mxu0 0.0
        %1387 = vmatprep.subr.mxu0 0.0
        %1388 = vmatpush1.msra.mxu0 0.0
        %1389 = vmatprep.subr.mxu0 0.0
        %1390 = vmatpush1.msra.mxu0 0.0
        %1391 = vmatprep.subr.mxu0 0.0
        %1392 = vmatpush1.msra.mxu0 0.0
        %1393 = vmatprep.subr.mxu0 0.0
        %1394 = vmatpush1.msra.mxu0 0.0
        %1395 = vmatprep.subr.mxu0 0.0
        %1396 = vmatpush1.msra.mxu0 0.0
        %1397 = vmatprep.subr.mxu0 0.0
        %1398 = vmatpush1.msra.mxu0 0.0
        %1399 = vmatprep.subr.mxu0 0.0
        %1400 = vmatpush1.msra.mxu0 0.0
        %1401 = vmatprep.subr.mxu0 0.0
        %1402 = vmatpush1.msra.mxu0 0.0
        %1403 = vmatprep.subr.mxu0 0.0
        %1404 = vmatpush1.msra.mxu0 0.0
        %1405 = vmatprep.subr.mxu0 0.0
        %1406 = vmatpush1.msra.mxu0 0.0
        %1407 = vmatprep.subr.mxu0 0.0
        %1408 = vmatpush1.msra.mxu0 0.0
        %1409 = vmatprep.subr.mxu0 0.0
        %1410 = vmatpush1.msra.mxu0 0.0
        %1411 = vmatprep.subr.mxu0 0.0
        %1412 = vmatpush1.msra.mxu0 0.0
        %1413 = vmatprep.subr.mxu0 0.0
        %1414 = vmatpush1.msra.mxu0 0.0
        %1415 = vmatprep.subr.mxu0 0.0
        %1416 = vmatpush1.msra.mxu0 0.0
        %1417 = vmatprep.subr.mxu0 0.0
        %1418 = vmatpush1.msra.mxu0 0.0
        %1419 = vmatprep.subr.mxu0 0.0
        %1420 = vmatpush1.msra.mxu0 0.0
        %1421 = vmatprep.subr.mxu0 0.0
        %1422 = vmatpush1.msra.mxu0 0.0
        %1423 = vmatprep.subr.mxu0 0.0
        %1424 = vmatpush1.msra.mxu0 0.0
        %1425 = vmatprep.subr.mxu0 0.0
        %1426 = vmatpush1.msra.mxu0 0.0
        %1427 = vmatprep.subr.mxu0 0.0
        %1428 = vmatpush1.msra.mxu0 0.0
        %1429 = vmatprep.subr.mxu0 0.0
        %1430 = vmatpush1.msra.mxu0 0.0
        %1431 = vmatprep.subr.mxu0 0.0
        %1432 = vmatpush1.msra.mxu0 0.0
        %1433 = vmatprep.subr.mxu0 0.0
        %1434 = vmatpush1.msra.mxu0 0.0
        %1435 = vmatprep.subr.mxu0 0.0
        %1436 = vmatpush1.msra.mxu0 0.0
        %1437 = vmatprep.subr.mxu0 0.0
        %1438 = vmatpush1.msra.mxu0 0.0
        %1439 = vmatprep.subr.mxu0 0.0
        %1440 = vmatpush1.msra.mxu0 0.0
        %1441 = vmatprep.subr.mxu0 0.0
        %1442 = vmatpush1.msra.mxu0 0.0
        %1443 = vmatprep.mubr.f32.mxu0 0.0
        %1444 = vmatmul.mubr.f32.gmra.mrb[0].mxu0 %v1377
        %v1445 = vpop.f32.mrb[0].mxu0
        %v1446 = vadd.f32 0.0, %v1445
        %v1447 = vpop.f32.mrb[0].mxu0
        %1448 = vdwg.mxu0
        %v1449 = vadd.f32 %v935, 0.0
        %v1450 = vadd.f32 %v1008, 0.0
        %v1451 = vadd.f32 %v1081, 0.0
        %v1452 = vadd.f32 %v1154, 0.0
        %v1453 = vadd.f32 %v1227, 0.0
        %v1454 = vadd.f32 %v1300, 0.0
        %v1455 = vadd.f32 %v1373, 0.0
        %v1456 = vadd.f32 %v1446, 0.0
        %v1465 = vrot.slane %v1450, 7
        %vm1466 = vcmask 1041409
        %v1467 = vsel %vm1466, %v1465, %v1449
        %v1468 = vrot.slane %v1451, 6
        %vm1469 = vcmask 1042434
        %v1470 = vsel %vm1469, %v1468, %v1467
        %v1471 = vrot.slane %v1452, 5
        %vm1472 = vcmask 1043459
        %v1473 = vsel %vm1472, %v1471, %v1470
        %v1474 = vrot.slane %v1453, 4
        %vm1475 = vcmask 1044484
        %v1476 = vsel %vm1475, %v1474, %v1473
        %v1477 = vrot.slane %v1454, 3
        %vm1478 = vcmask 1045509
        %v1479 = vsel %vm1478, %v1477, %v1476
        %v1480 = vrot.slane %v1455, 2
        %vm1481 = vcmask 1046534
        %v1482 = vsel %vm1481, %v1480, %v1479
        %v1483 = vrot.slane %v1456, 1
        %vm1484 = vcmask 1047559
        %v1485 = vsel %vm1484, %v1483, %v1482
        %v1487 = vsel %vm174, %v1485, 0.0
        %1488 = vst [vmem:[%s163] sm:$0xff] %v1487
        %s1489 = sand.u32 %s76, 1
        %s1490 = scalar_lea.sflag [#allocation6], %s1489
        %s1491 = sand.u32 %s76, 1
        %s1492 = smul.addr %s1491, 8
        %s1493 = scalar_lea.vmem [#allocation7], %s1492
        // Predicated region
        $region33: #{tpu_custom_call.1} parent=27 // pred_check
          %p1494 = pneg %p86
        $region34: #{tpu_custom_call.1} parent=27 // pred_check_branch
          %1496 = sbr.rel (%p1494) target = $region36
        $region35: #{tpu_custom_call.1} parent=27 // pred_region
          %s1498 = ssub.s32 128, 128
          %1499 = vsyncadd %s1490, %s1498
          %s1500 = smul.addr %s21, 128
          %s1501 = scalar_lea.hbm %s3, %s1500
          %s1503 = sshll.u32 %s1493, 4
          %s1504 = int_to_ptr.vmem [resolvable:$true] %s1503
          %1506 = dma.vmem_to_hbm [thread:$0]  %s1504, 128, %s1501, %s1490
        $region36: #{tpu_custom_call.1} parent=27 // pred_fallthru
          _
      $region28: #{tpu_custom_call.1} parent=5 // pred_fallthru
        _
      %p1507 = scmp.le.s32.totalorder 2, %s16
      // Predicated region
      $region37: #{tpu_custom_call.1} parent=5 // pred_check
        %p1508 = pneg %p1507
      $region38: #{tpu_custom_call.1} parent=5 // pred_check_branch
        %1510 = sbr.rel (%p1508) target = $region40
      $region39: #{tpu_custom_call.1} parent=5 // pred_region
        %s1511 = ssub.s32 %s16, 2
        // Predicated region
        $region41: #{tpu_custom_call.1} parent=39 // pred_check
          %p1512 = pneg %p92
        $region42: #{tpu_custom_call.1} parent=39 // pred_check_branch
          %1514 = sbr.rel (%p1512) target = $region44
        $region43: #{tpu_custom_call.1} parent=39 // pred_region
          %s1515 = sand.u32 %s77, 1
          %s1516 = scalar_lea.sflag [#allocation6], %s1515
          %s1517 = sand.u32 %s77, 1
          %s1518 = smul.addr %s1517, 8
          %s1519 = scalar_lea.vmem [#allocation7], %s1518
          %1520 = dma.done %s1516, 128
        $region44: #{tpu_custom_call.1} parent=39 // pred_fallthru
          _
      $region40: #{tpu_custom_call.1} parent=5 // pred_fallthru
        _
    $region6: #{tpu_custom_call.1} parent=1 // loop_footer
      %s20 = sadd.s32 1, %s16
    $region7: #{tpu_custom_call.1} parent=1 // loop_footer_branch
      %15 = sbr.rel target = $region3
    $region8: #{tpu_custom_call.1} parent=1 // loop_exit
      _
    %1521 = vsyncpa [#allocation5], 1
    %s1522 = scalar_lea.sflag [#allocation5], 1
    %1523 = vsyncpa %s1522, 1
    %1524 = vsyncpa [#allocation6], 1
    %s1525 = scalar_lea.sflag [#allocation6], 1
    %1526 = vsyncpa %s1525, 1

</llo_original>
